<compile_context>
chip_gen: v7x
topology: tpu7x:2x2x1
jax: 0.10.0
libtpu: 0.0.40
codegen_flags: <defaults>
</compile_context>

<pallas_src>
import functools

import jax
import jax.numpy as jnp
from jax.experimental import pallas as pl
from jax.experimental.pallas import tpu as pltpu


def mlp6_kernel(dT_ref, fw_ref, fb_ref, w1b_ref, b1_ref, w2T_ref, b2_ref,
                outT_ref):
    d = dT_ref[...]                                            # (6, TB)
    h = None
    for f in range(6):                                         # static unroll
        # Stage 1, feature f: Linear(1,64)+ReLU as a VPU broadcast FMA.
        chunk = jnp.maximum(fw_ref[f] * d[f:f + 1, :] + fb_ref[f], 0.0)  # (64, TB)
        # Stage 2 (fc1), fused per feature: one fully-useful K=64 MXU slice.
        part = jnp.dot(w1b_ref[f], chunk,
                       preferred_element_type=jnp.float32)     # (64, TB)
        h = part if h is None else h + part
    h = jnp.maximum(h + b1_ref[...], 0.0)                      # (64, TB)
    # Stage 3: fc2 (no activation).  (OUT, 64) @ (64, TB) -> (OUT, TB)
    outT_ref[...] = (jnp.dot(w2T_ref[...], h,
                             preferred_element_type=jnp.float32) + b2_ref[...])


def _round_up(x, m):
    return ((x + m - 1) // m) * m


def _choose_tile(batch, batch_tile):
    """Lane-dense batch tile: multiple of 128, capped for v7x VMEM, >=2 steps."""
    bp0 = _round_up(batch, 128)
    bt = max(128, (min(int(batch_tile), 8192) // 128) * 128)   # 128-mult, v7x-safe
    tb = min(bt, bp0)
    # Guarantee >=2 grid steps when possible so v7x's 2 TensorCores both work.
    if bp0 // tb < 2 and bp0 > 128:
        tb = _round_up(bp0 // 2, 128)
    bp = _round_up(batch, tb)
    return tb, bp


def _mlp6_pallas(dT, feat_w, feat_b, w1_blk, b1, w2T, b2, tb):
    """Persistent-layout entry point: (6, Bp) -> (OUT, Bp), Bp % tb == 0."""
    bp = dT.shape[1]
    out_dim = w2T.shape[0]
    grid = (bp // tb,)

    in_specs = [
        pl.BlockSpec((6, tb), lambda i: (0, i)),          # dataT tile
        pl.BlockSpec((6, 64, 1), lambda i: (0, 0, 0)),    # feat_w
        pl.BlockSpec((6, 64, 1), lambda i: (0, 0, 0)),    # feat_b
        pl.BlockSpec((6, 64, 64), lambda i: (0, 0, 0)),   # w1_blk
        pl.BlockSpec((64, 1), lambda i: (0, 0)),          # b1
        pl.BlockSpec((out_dim, 64), lambda i: (0, 0)),    # w2T
        pl.BlockSpec((out_dim, 1), lambda i: (0, 0)),     # b2
    ]
    out_specs = pl.BlockSpec((out_dim, tb), lambda i: (0, i))

    weight_bytes = 4 * (6 * 64 * 2 + 6 * 64 * 64 + 64 + out_dim * 64 + out_dim)
    cost = pl.CostEstimate(
        flops=2 * bp * (6 * 64 + 384 * 64 + 64 * out_dim),
        transcendentals=0,
        bytes_accessed=4 * bp * (6 + out_dim) + weight_bytes,
    )

    return pl.pallas_call(
        mlp6_kernel,
        out_shape=jax.ShapeDtypeStruct((out_dim, bp), jnp.float32),
        grid=grid,
        in_specs=in_specs,
        out_specs=out_specs,
        compiler_params=pltpu.CompilerParams(
            dimension_semantics=("parallel",),   # batch tiles over v7x's 2 TCs
            vmem_limit_bytes=32 * 1024 * 1024,   # valid on v5e/v6e/v7x
        ),
        cost_estimate=cost,
    )(dT, feat_w, feat_b, w1_blk, b1, w2T, b2)


@functools.partial(jax.jit, static_argnames=("batch_tile",))
def mlp6_forward(data, feat_w, feat_b, w1_blk, b1, w2T, b2, *, batch_tile=4096):
    """data: (B, 6) float32 -> (B, OUT) float32, matching MLPModel6.forward."""
    b = data.shape[0]
    tb, bp = _choose_tile(b, batch_tile)
    # Single pad of the transposed input (batch -> lane axis). Callers that keep
    # the (6,B)/(OUT,B) layout persistent should call _mlp6_pallas directly.
    dT = jnp.pad(data.astype(jnp.float32).T, ((0, 0), (0, bp - b)))
    outT = _mlp6_pallas(dT, feat_w, feat_b, w1_blk, b1, w2T, b2, tb)
    return outT[:, :b].T


def init_params(key, output_dim):
    """Deterministic init mimicking PyTorch nn.Linear (uniform +/- 1/sqrt(fan_in))."""
    ks = jax.random.split(key, 16)

    # Six Linear(1, 64) layers: weight (64, 1), bias (64,). fan_in = 1.
    feat_w = jnp.stack([jax.random.uniform(ks[f], (64, 1), jnp.float32, -1.0, 1.0)
                        for f in range(6)])                       # (6, 64, 1)
    feat_b = jnp.stack([jax.random.uniform(ks[6 + f], (64, 1), jnp.float32, -1.0, 1.0)
                        for f in range(6)])                       # (6, 64, 1)

    # fc1: Linear(384, 64), PyTorch weight layout (out, in) = (64, 384).
    bound1 = 1.0 / jnp.sqrt(384.0)
    w1 = jax.random.uniform(ks[12], (64, 384), jnp.float32, -bound1, bound1)
    w1_blk = jnp.stack([w1[:, f * 64:(f + 1) * 64] for f in range(6)])  # (6, 64, 64)
    b1 = jax.random.uniform(ks[13], (64, 1), jnp.float32, -bound1, bound1)

    # fc2: Linear(64, output_dim).
    bound2 = 1.0 / jnp.sqrt(64.0)
    w2T = jax.random.uniform(ks[14], (output_dim, 64), jnp.float32, -bound2, bound2)
    b2 = jax.random.uniform(ks[15], (output_dim, 1), jnp.float32, -bound2, bound2)

    return feat_w, feat_b, w1_blk, b1, w2T, b2


def reference_forward(data, feat_w, feat_b, w1_blk, b1, w2T, b2):
    """Pure-JAX reference mirroring the PyTorch module exactly."""
    branches = []
    for f in range(6):
        wf = feat_w[f, :, 0]                                      # (64,)
        bf = feat_b[f, :, 0]                                      # (64,)
        branches.append(jnp.maximum(data[:, f:f + 1] * wf[None, :] + bf[None, :], 0.0))
    x_all = jnp.concatenate(branches, axis=1)                     # (B, 384)
    w1 = jnp.concatenate([w1_blk[f] for f in range(6)], axis=1)   # (64, 384)
    h = jnp.maximum(x_all @ w1.T + b1[:, 0][None, :], 0.0)        # (B, 64)
    return h @ w2T.T + b2[:, 0][None, :]                          # (B, OUT)


if __name__ == "__main__":
    key = jax.random.PRNGKey(0)
    k_data, k_params = jax.random.split(key)

    B = 8
    OUTPUT_DIM = 8
    data = jax.random.normal(k_data, (B, 6), dtype=jnp.float32)

    params = init_params(k_params, OUTPUT_DIM)

    out = mlp6_forward(data, *params)
    out = jax.block_until_ready(out)

    ref = reference_forward(data, *params)
    assert out.shape == (B, OUTPUT_DIM)
    assert jnp.allclose(out, ref, atol=1e-4, rtol=1e-4), "Pallas output mismatch vs reference"

    print("KERNEL_OK")
</pallas_src>

<mosaic_0001>
module attributes {stable_mosaic.version = 11 : i64} {
  func.func @mlp6_kernel(%arg0: i32, %arg1: memref<6x128xf32, #tpu.memory_space<vmem>>, %arg2: memref<6x64x1xf32, #tpu.memory_space<vmem>>, %arg3: memref<6x64x1xf32, #tpu.memory_space<vmem>>, %arg4: memref<6x64x64xf32, #tpu.memory_space<vmem>>, %arg5: memref<64x1xf32, #tpu.memory_space<vmem>>, %arg6: memref<8x64xf32, #tpu.memory_space<vmem>>, %arg7: memref<8x1xf32, #tpu.memory_space<vmem>>, %arg8: memref<8x128xf32, #tpu.memory_space<vmem>>) attributes {dimension_semantics = [#tpu.dimension_semantics<parallel>], iteration_bounds = array<i64: 1>, scalar_prefetch = 0 : i64, scratch_operands = 0 : i64, tpu.core_type = #tpu.core_type<tc>, window_params = [{transform_indices = @transform_0, window_bounds = array<i64: 6, 128>}, {pipeline_mode = #tpu.pipeline_mode<synchronous>, transform_indices = @transform_1, window_bounds = array<i64: 6, 64, 1>}, {pipeline_mode = #tpu.pipeline_mode<synchronous>, transform_indices = @transform_2, window_bounds = array<i64: 6, 64, 1>}, {pipeline_mode = #tpu.pipeline_mode<synchronous>, transform_indices = @transform_3, window_bounds = array<i64: 6, 64, 64>}, {pipeline_mode = #tpu.pipeline_mode<synchronous>, transform_indices = @transform_4, window_bounds = array<i64: 64, 1>}, {pipeline_mode = #tpu.pipeline_mode<synchronous>, transform_indices = @transform_5, window_bounds = array<i64: 8, 64>}, {pipeline_mode = #tpu.pipeline_mode<synchronous>, transform_indices = @transform_6, window_bounds = array<i64: 8, 1>}, {transform_indices = @transform_7, window_bounds = array<i64: 8, 128>}]} {
    %c0 = arith.constant 0 : index
    %c0_0 = arith.constant 0 : index
    %0 = vector.load %arg1[%c0, %c0_0] : memref<6x128xf32, #tpu.memory_space<vmem>>, vector<6x128xf32>
    %c0_1 = arith.constant 0 : index
    %c0_2 = arith.constant 0 : index
    %c0_3 = arith.constant 0 : index
    %1 = vector.load %arg2[%c0_1, %c0_2, %c0_3] : memref<6x64x1xf32, #tpu.memory_space<vmem>>, vector<1x64x1xf32>
    %2 = vector.shape_cast %1 : vector<1x64x1xf32> to vector<64x1xf32>
    %3 = vector.extract_strided_slice %0 {offsets = [0, 0], sizes = [1, 128], strides = [1, 1]} : vector<6x128xf32> to vector<1x128xf32>
    %4 = vector.broadcast %2 : vector<64x1xf32> to vector<64x128xf32>
    %5 = vector.broadcast %3 : vector<1x128xf32> to vector<64x128xf32>
    %6 = arith.mulf %4, %5 : vector<64x128xf32>
    %c0_4 = arith.constant 0 : index
    %c0_5 = arith.constant 0 : index
    %c0_6 = arith.constant 0 : index
    %7 = vector.load %arg3[%c0_4, %c0_5, %c0_6] : memref<6x64x1xf32, #tpu.memory_space<vmem>>, vector<1x64x1xf32>
    %8 = vector.shape_cast %7 : vector<1x64x1xf32> to vector<64x1xf32>
    %9 = vector.broadcast %8 : vector<64x1xf32> to vector<64x128xf32>
    %10 = arith.addf %6, %9 : vector<64x128xf32>
    %cst = arith.constant 0.000000e+00 : f32
    %11 = vector.broadcast %cst : f32 to vector<64x128xf32>
    %12 = arith.maximumf %10, %11 : vector<64x128xf32>
    %c0_7 = arith.constant 0 : index
    %c0_8 = arith.constant 0 : index
    %c0_9 = arith.constant 0 : index
    %13 = vector.load %arg4[%c0_7, %c0_8, %c0_9] : memref<6x64x64xf32, #tpu.memory_space<vmem>>, vector<1x64x64xf32>
    %14 = vector.shape_cast %13 : vector<1x64x64xf32> to vector<64x64xf32>
    %cst_10 = arith.constant dense<0.000000e+00> : vector<64x128xf32>
    %15 = tpu.matmul %14, %12, %cst_10 {dimension_numbers = #tpu.dot_dimension_numbers<[1], [0], [0], [1], [0, 0, 1, 1], [], []>} : vector<64x64xf32>, vector<64x128xf32>, vector<64x128xf32> -> vector<64x128xf32>
    %c1 = arith.constant 1 : index
    %c0_11 = arith.constant 0 : index
    %c0_12 = arith.constant 0 : index
    %16 = vector.load %arg2[%c1, %c0_11, %c0_12] : memref<6x64x1xf32, #tpu.memory_space<vmem>>, vector<1x64x1xf32>
    %17 = vector.shape_cast %16 : vector<1x64x1xf32> to vector<64x1xf32>
    %18 = vector.extract_strided_slice %0 {offsets = [1, 0], sizes = [1, 128], strides = [1, 1]} : vector<6x128xf32> to vector<1x128xf32>
    %19 = vector.broadcast %17 : vector<64x1xf32> to vector<64x128xf32>
    %20 = vector.broadcast %18 : vector<1x128xf32> to vector<64x128xf32>
    %21 = arith.mulf %19, %20 : vector<64x128xf32>
    %c1_13 = arith.constant 1 : index
    %c0_14 = arith.constant 0 : index
    %c0_15 = arith.constant 0 : index
    %22 = vector.load %arg3[%c1_13, %c0_14, %c0_15] : memref<6x64x1xf32, #tpu.memory_space<vmem>>, vector<1x64x1xf32>
    %23 = vector.shape_cast %22 : vector<1x64x1xf32> to vector<64x1xf32>
    %24 = vector.broadcast %23 : vector<64x1xf32> to vector<64x128xf32>
    %25 = arith.addf %21, %24 : vector<64x128xf32>
    %cst_16 = arith.constant 0.000000e+00 : f32
    %26 = vector.broadcast %cst_16 : f32 to vector<64x128xf32>
    %27 = arith.maximumf %25, %26 : vector<64x128xf32>
    %c1_17 = arith.constant 1 : index
    %c0_18 = arith.constant 0 : index
    %c0_19 = arith.constant 0 : index
    %28 = vector.load %arg4[%c1_17, %c0_18, %c0_19] : memref<6x64x64xf32, #tpu.memory_space<vmem>>, vector<1x64x64xf32>
    %29 = vector.shape_cast %28 : vector<1x64x64xf32> to vector<64x64xf32>
    %cst_20 = arith.constant dense<0.000000e+00> : vector<64x128xf32>
    %30 = tpu.matmul %29, %27, %cst_20 {dimension_numbers = #tpu.dot_dimension_numbers<[1], [0], [0], [1], [0, 0, 1, 1], [], []>} : vector<64x64xf32>, vector<64x128xf32>, vector<64x128xf32> -> vector<64x128xf32>
    %31 = arith.addf %15, %30 : vector<64x128xf32>
    %c2 = arith.constant 2 : index
    %c0_21 = arith.constant 0 : index
    %c0_22 = arith.constant 0 : index
    %32 = vector.load %arg2[%c2, %c0_21, %c0_22] : memref<6x64x1xf32, #tpu.memory_space<vmem>>, vector<1x64x1xf32>
    %33 = vector.shape_cast %32 : vector<1x64x1xf32> to vector<64x1xf32>
    %34 = vector.extract_strided_slice %0 {offsets = [2, 0], sizes = [1, 128], strides = [1, 1]} : vector<6x128xf32> to vector<1x128xf32>
    %35 = vector.broadcast %33 : vector<64x1xf32> to vector<64x128xf32>
    %36 = vector.broadcast %34 : vector<1x128xf32> to vector<64x128xf32>
    %37 = arith.mulf %35, %36 : vector<64x128xf32>
    %c2_23 = arith.constant 2 : index
    %c0_24 = arith.constant 0 : index
    %c0_25 = arith.constant 0 : index
    %38 = vector.load %arg3[%c2_23, %c0_24, %c0_25] : memref<6x64x1xf32, #tpu.memory_space<vmem>>, vector<1x64x1xf32>
    %39 = vector.shape_cast %38 : vector<1x64x1xf32> to vector<64x1xf32>
    %40 = vector.broadcast %39 : vector<64x1xf32> to vector<64x128xf32>
    %41 = arith.addf %37, %40 : vector<64x128xf32>
    %cst_26 = arith.constant 0.000000e+00 : f32
    %42 = vector.broadcast %cst_26 : f32 to vector<64x128xf32>
    %43 = arith.maximumf %41, %42 : vector<64x128xf32>
    %c2_27 = arith.constant 2 : index
    %c0_28 = arith.constant 0 : index
    %c0_29 = arith.constant 0 : index
    %44 = vector.load %arg4[%c2_27, %c0_28, %c0_29] : memref<6x64x64xf32, #tpu.memory_space<vmem>>, vector<1x64x64xf32>
    %45 = vector.shape_cast %44 : vector<1x64x64xf32> to vector<64x64xf32>
    %cst_30 = arith.constant dense<0.000000e+00> : vector<64x128xf32>
    %46 = tpu.matmul %45, %43, %cst_30 {dimension_numbers = #tpu.dot_dimension_numbers<[1], [0], [0], [1], [0, 0, 1, 1], [], []>} : vector<64x64xf32>, vector<64x128xf32>, vector<64x128xf32> -> vector<64x128xf32>
    %47 = arith.addf %31, %46 : vector<64x128xf32>
    %c3 = arith.constant 3 : index
    %c0_31 = arith.constant 0 : index
    %c0_32 = arith.constant 0 : index
    %48 = vector.load %arg2[%c3, %c0_31, %c0_32] : memref<6x64x1xf32, #tpu.memory_space<vmem>>, vector<1x64x1xf32>
    %49 = vector.shape_cast %48 : vector<1x64x1xf32> to vector<64x1xf32>
    %50 = vector.extract_strided_slice %0 {offsets = [3, 0], sizes = [1, 128], strides = [1, 1]} : vector<6x128xf32> to vector<1x128xf32>
    %51 = vector.broadcast %49 : vector<64x1xf32> to vector<64x128xf32>
    %52 = vector.broadcast %50 : vector<1x128xf32> to vector<64x128xf32>
    %53 = arith.mulf %51, %52 : vector<64x128xf32>
    %c3_33 = arith.constant 3 : index
    %c0_34 = arith.constant 0 : index
    %c0_35 = arith.constant 0 : index
    %54 = vector.load %arg3[%c3_33, %c0_34, %c0_35] : memref<6x64x1xf32, #tpu.memory_space<vmem>>, vector<1x64x1xf32>
    %55 = vector.shape_cast %54 : vector<1x64x1xf32> to vector<64x1xf32>
    %56 = vector.broadcast %55 : vector<64x1xf32> to vector<64x128xf32>
    %57 = arith.addf %53, %56 : vector<64x128xf32>
    %cst_36 = arith.constant 0.000000e+00 : f32
    %58 = vector.broadcast %cst_36 : f32 to vector<64x128xf32>
    %59 = arith.maximumf %57, %58 : vector<64x128xf32>
    %c3_37 = arith.constant 3 : index
    %c0_38 = arith.constant 0 : index
    %c0_39 = arith.constant 0 : index
    %60 = vector.load %arg4[%c3_37, %c0_38, %c0_39] : memref<6x64x64xf32, #tpu.memory_space<vmem>>, vector<1x64x64xf32>
    %61 = vector.shape_cast %60 : vector<1x64x64xf32> to vector<64x64xf32>
    %cst_40 = arith.constant dense<0.000000e+00> : vector<64x128xf32>
    %62 = tpu.matmul %61, %59, %cst_40 {dimension_numbers = #tpu.dot_dimension_numbers<[1], [0], [0], [1], [0, 0, 1, 1], [], []>} : vector<64x64xf32>, vector<64x128xf32>, vector<64x128xf32> -> vector<64x128xf32>
    %63 = arith.addf %47, %62 : vector<64x128xf32>
    %c4 = arith.constant 4 : index
    %c0_41 = arith.constant 0 : index
    %c0_42 = arith.constant 0 : index
    %64 = vector.load %arg2[%c4, %c0_41, %c0_42] : memref<6x64x1xf32, #tpu.memory_space<vmem>>, vector<1x64x1xf32>
    %65 = vector.shape_cast %64 : vector<1x64x1xf32> to vector<64x1xf32>
    %66 = vector.extract_strided_slice %0 {offsets = [4, 0], sizes = [1, 128], strides = [1, 1]} : vector<6x128xf32> to vector<1x128xf32>
    %67 = vector.broadcast %65 : vector<64x1xf32> to vector<64x128xf32>
    %68 = vector.broadcast %66 : vector<1x128xf32> to vector<64x128xf32>
    %69 = arith.mulf %67, %68 : vector<64x128xf32>
    %c4_43 = arith.constant 4 : index
    %c0_44 = arith.constant 0 : index
    %c0_45 = arith.constant 0 : index
    %70 = vector.load %arg3[%c4_43, %c0_44, %c0_45] : memref<6x64x1xf32, #tpu.memory_space<vmem>>, vector<1x64x1xf32>
    %71 = vector.shape_cast %70 : vector<1x64x1xf32> to vector<64x1xf32>
    %72 = vector.broadcast %71 : vector<64x1xf32> to vector<64x128xf32>
    %73 = arith.addf %69, %72 : vector<64x128xf32>
    %cst_46 = arith.constant 0.000000e+00 : f32
    %74 = vector.broadcast %cst_46 : f32 to vector<64x128xf32>
    %75 = arith.maximumf %73, %74 : vector<64x128xf32>
    %c4_47 = arith.constant 4 : index
    %c0_48 = arith.constant 0 : index
    %c0_49 = arith.constant 0 : index
    %76 = vector.load %arg4[%c4_47, %c0_48, %c0_49] : memref<6x64x64xf32, #tpu.memory_space<vmem>>, vector<1x64x64xf32>
    %77 = vector.shape_cast %76 : vector<1x64x64xf32> to vector<64x64xf32>
    %cst_50 = arith.constant dense<0.000000e+00> : vector<64x128xf32>
    %78 = tpu.matmul %77, %75, %cst_50 {dimension_numbers = #tpu.dot_dimension_numbers<[1], [0], [0], [1], [0, 0, 1, 1], [], []>} : vector<64x64xf32>, vector<64x128xf32>, vector<64x128xf32> -> vector<64x128xf32>
    %79 = arith.addf %63, %78 : vector<64x128xf32>
    %c5 = arith.constant 5 : index
    %c0_51 = arith.constant 0 : index
    %c0_52 = arith.constant 0 : index
    %80 = vector.load %arg2[%c5, %c0_51, %c0_52] : memref<6x64x1xf32, #tpu.memory_space<vmem>>, vector<1x64x1xf32>
    %81 = vector.shape_cast %80 : vector<1x64x1xf32> to vector<64x1xf32>
    %82 = vector.extract_strided_slice %0 {offsets = [5, 0], sizes = [1, 128], strides = [1, 1]} : vector<6x128xf32> to vector<1x128xf32>
    %83 = vector.broadcast %81 : vector<64x1xf32> to vector<64x128xf32>
    %84 = vector.broadcast %82 : vector<1x128xf32> to vector<64x128xf32>
    %85 = arith.mulf %83, %84 : vector<64x128xf32>
    %c5_53 = arith.constant 5 : index
    %c0_54 = arith.constant 0 : index
    %c0_55 = arith.constant 0 : index
    %86 = vector.load %arg3[%c5_53, %c0_54, %c0_55] : memref<6x64x1xf32, #tpu.memory_space<vmem>>, vector<1x64x1xf32>
    %87 = vector.shape_cast %86 : vector<1x64x1xf32> to vector<64x1xf32>
    %88 = vector.broadcast %87 : vector<64x1xf32> to vector<64x128xf32>
    %89 = arith.addf %85, %88 : vector<64x128xf32>
    %cst_56 = arith.constant 0.000000e+00 : f32
    %90 = vector.broadcast %cst_56 : f32 to vector<64x128xf32>
    %91 = arith.maximumf %89, %90 : vector<64x128xf32>
    %c5_57 = arith.constant 5 : index
    %c0_58 = arith.constant 0 : index
    %c0_59 = arith.constant 0 : index
    %92 = vector.load %arg4[%c5_57, %c0_58, %c0_59] : memref<6x64x64xf32, #tpu.memory_space<vmem>>, vector<1x64x64xf32>
    %93 = vector.shape_cast %92 : vector<1x64x64xf32> to vector<64x64xf32>
    %cst_60 = arith.constant dense<0.000000e+00> : vector<64x128xf32>
    %94 = tpu.matmul %93, %91, %cst_60 {dimension_numbers = #tpu.dot_dimension_numbers<[1], [0], [0], [1], [0, 0, 1, 1], [], []>} : vector<64x64xf32>, vector<64x128xf32>, vector<64x128xf32> -> vector<64x128xf32>
    %95 = arith.addf %79, %94 : vector<64x128xf32>
    %c0_61 = arith.constant 0 : index
    %c0_62 = arith.constant 0 : index
    %96 = vector.load %arg5[%c0_61, %c0_62] : memref<64x1xf32, #tpu.memory_space<vmem>>, vector<64x1xf32>
    %97 = vector.broadcast %96 : vector<64x1xf32> to vector<64x128xf32>
    %98 = arith.addf %95, %97 : vector<64x128xf32>
    %cst_63 = arith.constant 0.000000e+00 : f32
    %99 = vector.broadcast %cst_63 : f32 to vector<64x128xf32>
    %100 = arith.maximumf %98, %99 : vector<64x128xf32>
    %c0_64 = arith.constant 0 : index
    %c0_65 = arith.constant 0 : index
    %101 = vector.load %arg6[%c0_64, %c0_65] : memref<8x64xf32, #tpu.memory_space<vmem>>, vector<8x64xf32>
    %cst_66 = arith.constant dense<0.000000e+00> : vector<8x128xf32>
    %102 = tpu.matmul %101, %100, %cst_66 {dimension_numbers = #tpu.dot_dimension_numbers<[1], [0], [0], [1], [0, 0, 1, 1], [], []>} : vector<8x64xf32>, vector<64x128xf32>, vector<8x128xf32> -> vector<8x128xf32>
    %c0_67 = arith.constant 0 : index
    %c0_68 = arith.constant 0 : index
    %103 = vector.load %arg7[%c0_67, %c0_68] : memref<8x1xf32, #tpu.memory_space<vmem>>, vector<8x1xf32>
    %104 = vector.broadcast %103 : vector<8x1xf32> to vector<8x128xf32>
    %105 = arith.addf %102, %104 : vector<8x128xf32>
    %c0_69 = arith.constant 0 : index
    %c0_70 = arith.constant 0 : index
    %106 = vector.load %arg8[%c0_69, %c0_70] : memref<8x128xf32, #tpu.memory_space<vmem>>, vector<8x128xf32>
    tpu.vector_store %arg8[%c0_69, %c0_70], %105 {strides = array<i32>} : memref<8x128xf32, #tpu.memory_space<vmem>>, vector<8x128xf32>,
    return
  }
  func.func @transform_0(%arg0: i32) -> (i32, i32) {
    %c0_i32 = arith.constant 0 : i32
    %c0_i32_0 = arith.constant 0 : i32
    return %c0_i32, %arg0 : i32, i32
  }
  func.func @transform_1(%arg0: i32) -> (i32, i32, i32) {
    %c0_i32 = arith.constant 0 : i32
    %c0_i32_0 = arith.constant 0 : i32
    %c0_i32_1 = arith.constant 0 : i32
    %c0_i32_2 = arith.constant 0 : i32
    return %c0_i32, %c0_i32_0, %c0_i32_1 : i32, i32, i32
  }
  func.func @transform_2(%arg0: i32) -> (i32, i32, i32) {
    %c0_i32 = arith.constant 0 : i32
    %c0_i32_0 = arith.constant 0 : i32
    %c0_i32_1 = arith.constant 0 : i32
    %c0_i32_2 = arith.constant 0 : i32
    return %c0_i32, %c0_i32_0, %c0_i32_1 : i32, i32, i32
  }
  func.func @transform_3(%arg0: i32) -> (i32, i32, i32) {
    %c0_i32 = arith.constant 0 : i32
    %c0_i32_0 = arith.constant 0 : i32
    %c0_i32_1 = arith.constant 0 : i32
    %c0_i32_2 = arith.constant 0 : i32
    return %c0_i32, %c0_i32_0, %c0_i32_1 : i32, i32, i32
  }
  func.func @transform_4(%arg0: i32) -> (i32, i32) {
    %c0_i32 = arith.constant 0 : i32
    %c0_i32_0 = arith.constant 0 : i32
    %c0_i32_1 = arith.constant 0 : i32
    return %c0_i32, %c0_i32_0 : i32, i32
  }
  func.func @transform_5(%arg0: i32) -> (i32, i32) {
    %c0_i32 = arith.constant 0 : i32
    %c0_i32_0 = arith.constant 0 : i32
    %c0_i32_1 = arith.constant 0 : i32
    return %c0_i32, %c0_i32_0 : i32, i32
  }
  func.func @transform_6(%arg0: i32) -> (i32, i32) {
    %c0_i32 = arith.constant 0 : i32
    %c0_i32_0 = arith.constant 0 : i32
    %c0_i32_1 = arith.constant 0 : i32
    return %c0_i32, %c0_i32_0 : i32, i32
  }
  func.func @transform_7(%arg0: i32) -> (i32, i32) {
    %c0_i32 = arith.constant 0 : i32
    %c0_i32_0 = arith.constant 0 : i32
    return %c0_i32, %arg0 : i32, i32
  }
}

</mosaic_0001>

<llo_original>
// kernel: mlp6_forward.1
$region0: #{mlp6_forward.1}
  #allocation0 [shape = 'u32[]', space=smem, size = 0x4, offset = 0x4, fixed_abs, tag = 'smem constant byte address 0x4 - core index']
  #allocation1 [shape = 'u32[144,128]{1,0:T(1,128)}', space=vmem, size = 0x12000, scoped, tag = 'internal scratch']
  %s0 = inlined_call_operand.vmem [shape: f32[6,128], index: 0, kind: input, shape index: {}]
  %s1 = inlined_call_operand.vmem [shape: f32[6,64,1], index: 1, kind: input, shape index: {}]
  %s2 = inlined_call_operand.vmem [shape: f32[6,64,1], index: 2, kind: input, shape index: {}]
  %s3 = inlined_call_operand.vmem [shape: f32[6,64,64], index: 3, kind: input, shape index: {}]
  %s4 = inlined_call_operand.vmem [shape: f32[64,1], index: 4, kind: input, shape index: {}]
  %s5 = inlined_call_operand.vmem [shape: f32[8,64], index: 5, kind: input, shape index: {}]
  %s6 = inlined_call_operand.vmem [shape: f32[8,1], index: 6, kind: input, shape index: {}]
  %s7 = inlined_call_operand.vmem [shape: f32[8,128], index: 7, kind: output, shape index: {}]
  %s8 = sld [smem:[#allocation0]]
  $region38: #{mlp6_forward.1} parent=0
    _
  %s10 = ssub.s32 1, %s8
  %s11 = scalar_select 0, %s10, %s8
  // Predicated region
  $region2: #{mlp6_forward.1} parent=0 // pred_check
    _
  $region3: #{mlp6_forward.1} parent=0 // pred_check_branch
    %13 = sbr.rel (0) target = $region5
  $region4: #{mlp6_forward.1} parent=0 // pred_region
    _
  $region5: #{mlp6_forward.1} parent=0 // pred_fallthru
    _
  // Predicated region
  $region6: #{mlp6_forward.1} parent=0 // pred_check
    _
  $region7: #{mlp6_forward.1} parent=0 // pred_check_branch
    %15 = sbr.rel (0) target = $region9
  $region8: #{mlp6_forward.1} parent=0 // pred_region
    _
  $region9: #{mlp6_forward.1} parent=0 // pred_fallthru
    _
  // Predicated region
  $region10: #{mlp6_forward.1} parent=0 // pred_check
    _
  $region11: #{mlp6_forward.1} parent=0 // pred_check_branch
    %17 = sbr.rel (0) target = $region13
  $region12: #{mlp6_forward.1} parent=0 // pred_region
    _
  $region13: #{mlp6_forward.1} parent=0 // pred_fallthru
    _
  // Predicated region
  $region14: #{mlp6_forward.1} parent=0 // pred_check
    _
  $region15: #{mlp6_forward.1} parent=0 // pred_check_branch
    %19 = sbr.rel (0) target = $region17
  $region16: #{mlp6_forward.1} parent=0 // pred_region
    _
  $region17: #{mlp6_forward.1} parent=0 // pred_fallthru
    _
  // Predicated region
  $region18: #{mlp6_forward.1} parent=0 // pred_check
    _
  $region19: #{mlp6_forward.1} parent=0 // pred_check_branch
    %21 = sbr.rel (0) target = $region21
  $region20: #{mlp6_forward.1} parent=0 // pred_region
    _
  $region21: #{mlp6_forward.1} parent=0 // pred_fallthru
    _
  // Predicated region
  $region22: #{mlp6_forward.1} parent=0 // pred_check
    _
  $region23: #{mlp6_forward.1} parent=0 // pred_check_branch
    %23 = sbr.rel (0) target = $region25
  $region24: #{mlp6_forward.1} parent=0 // pred_region
    _
  $region25: #{mlp6_forward.1} parent=0 // pred_fallthru
    _
  // Predicated region
  $region26: #{mlp6_forward.1} parent=0 // pred_check
    _
  $region27: #{mlp6_forward.1} parent=0 // pred_check_branch
    %25 = sbr.rel (0) target = $region29
  $region28: #{mlp6_forward.1} parent=0 // pred_region
    _
  $region29: #{mlp6_forward.1} parent=0 // pred_fallthru
    _
  %v26 = vld [vmem:[%s0] sm:$0x3f]
  %v27 = vld [vmem:[%s1] sm:$0xff]
  %v28 = vld [vmem:[%s1 + $0x8] sm:$0xff]
  %v29 = vld [vmem:[%s1 + $0x10] sm:$0xff]
  %v30 = vld [vmem:[%s1 + $0x18] sm:$0xff]
  %v31 = vld [vmem:[%s1 + $0x20] sm:$0xff]
  %v32 = vld [vmem:[%s1 + $0x28] sm:$0xff]
  %v33 = vld [vmem:[%s1 + $0x30] sm:$0xff]
  %v34 = vld [vmem:[%s1 + $0x38] sm:$0xff]
  %36 = vset.pattern.permute.xlu0 0
  %37 = vperm.xlu0 %36, %v27
  %v38 = vpop.permute.xlu0 %37
  %41 = vset.pattern.permute.xlu0 0
  %42 = vperm.xlu0 %41, %v28
  %v43 = vpop.permute.xlu0 %42
  %46 = vset.pattern.permute.xlu0 0
  %47 = vperm.xlu0 %46, %v29
  %v48 = vpop.permute.xlu0 %47
  %51 = vset.pattern.permute.xlu0 0
  %52 = vperm.xlu0 %51, %v30
  %v53 = vpop.permute.xlu0 %52
  %56 = vset.pattern.permute.xlu0 0
  %57 = vperm.xlu0 %56, %v31
  %v58 = vpop.permute.xlu0 %57
  %61 = vset.pattern.permute.xlu0 0
  %62 = vperm.xlu0 %61, %v32
  %v63 = vpop.permute.xlu0 %62
  %66 = vset.pattern.permute.xlu0 0
  %67 = vperm.xlu0 %66, %v33
  %v68 = vpop.permute.xlu0 %67
  %71 = vset.pattern.permute.xlu0 0
  %72 = vperm.xlu0 %71, %v34
  %v73 = vpop.permute.xlu0 %72
  %v75 = vlaneseq
  %v76 = vshrl.u32 %v75, 7
  %v77 = vsub.s32 0, %v76
  %v78 = vrot.slane %v26, %v77
  %v79 = vmul.f32 %v38, %v78
  %v80 = vmul.f32 %v43, %v78
  %v81 = vmul.f32 %v48, %v78
  %v82 = vmul.f32 %v53, %v78
  %v83 = vmul.f32 %v58, %v78
  %v84 = vmul.f32 %v63, %v78
  %v85 = vmul.f32 %v68, %v78
  %v86 = vmul.f32 %v73, %v78
  %v87 = vld [vmem:[%s2] sm:$0xff]
  %v88 = vld [vmem:[%s2 + $0x8] sm:$0xff]
  %v89 = vld [vmem:[%s2 + $0x10] sm:$0xff]
  %v90 = vld [vmem:[%s2 + $0x18] sm:$0xff]
  %v91 = vld [vmem:[%s2 + $0x20] sm:$0xff]
  %v92 = vld [vmem:[%s2 + $0x28] sm:$0xff]
  %v93 = vld [vmem:[%s2 + $0x30] sm:$0xff]
  %v94 = vld [vmem:[%s2 + $0x38] sm:$0xff]
  %96 = vset.pattern.permute.xlu0 0
  %97 = vperm.xlu0 %96, %v87
  %v98 = vpop.permute.xlu0 %97
  %101 = vset.pattern.permute.xlu0 0
  %102 = vperm.xlu0 %101, %v88
  %v103 = vpop.permute.xlu0 %102
  %106 = vset.pattern.permute.xlu0 0
  %107 = vperm.xlu0 %106, %v89
  %v108 = vpop.permute.xlu0 %107
  %111 = vset.pattern.permute.xlu0 0
  %112 = vperm.xlu0 %111, %v90
  %v113 = vpop.permute.xlu0 %112
  %116 = vset.pattern.permute.xlu0 0
  %117 = vperm.xlu0 %116, %v91
  %v118 = vpop.permute.xlu0 %117
  %121 = vset.pattern.permute.xlu0 0
  %122 = vperm.xlu0 %121, %v92
  %v123 = vpop.permute.xlu0 %122
  %126 = vset.pattern.permute.xlu0 0
  %127 = vperm.xlu0 %126, %v93
  %v128 = vpop.permute.xlu0 %127
  %131 = vset.pattern.permute.xlu0 0
  %132 = vperm.xlu0 %131, %v94
  %v133 = vpop.permute.xlu0 %132
  %v135 = vadd.f32 %v79, %v98
  %v136 = vadd.f32 %v80, %v103
  %v137 = vadd.f32 %v81, %v108
  %v138 = vadd.f32 %v82, %v113
  %v139 = vadd.f32 %v83, %v118
  %v140 = vadd.f32 %v84, %v123
  %v141 = vadd.f32 %v85, %v128
  %v142 = vadd.f32 %v86, %v133
  %v143 = vmax.f32 %v135, 0.0
  %v144 = vmax.f32 %v136, 0.0
  %v145 = vmax.f32 %v137, 0.0
  %v146 = vmax.f32 %v138, 0.0
  %v147 = vmax.f32 %v139, 0.0
  %v148 = vmax.f32 %v140, 0.0
  %v149 = vmax.f32 %v141, 0.0
  %v150 = vmax.f32 %v142, 0.0
  %v151 = vld [vmem:[%s3] sm:$0xff]
  %v152 = vld [vmem:[%s3 + $0x8] sm:$0xff]
  %v153 = vld [vmem:[%s3 + $0x10] sm:$0xff]
  %v154 = vld [vmem:[%s3 + $0x18] sm:$0xff]
  %v155 = vld [vmem:[%s3 + $0x20] sm:$0xff]
  %v156 = vld [vmem:[%s3 + $0x28] sm:$0xff]
  %v157 = vld [vmem:[%s3 + $0x30] sm:$0xff]
  %v158 = vld [vmem:[%s3 + $0x38] sm:$0xff]
  %s159 = scalar_lea.vmem %s1, 64
  %v160 = vld [vmem:[%s159] sm:$0xff]
  %v161 = vld [vmem:[%s159 + $0x8] sm:$0xff]
  %v162 = vld [vmem:[%s159 + $0x10] sm:$0xff]
  %v163 = vld [vmem:[%s159 + $0x18] sm:$0xff]
  %v164 = vld [vmem:[%s159 + $0x20] sm:$0xff]
  %v165 = vld [vmem:[%s159 + $0x28] sm:$0xff]
  %v166 = vld [vmem:[%s159 + $0x30] sm:$0xff]
  %v167 = vld [vmem:[%s159 + $0x38] sm:$0xff]
  %169 = vset.pattern.permute.xlu0 0
  %170 = vperm.xlu0 %169, %v160
  %v171 = vpop.permute.xlu0 %170
  %174 = vset.pattern.permute.xlu0 0
  %175 = vperm.xlu0 %174, %v161
  %v176 = vpop.permute.xlu0 %175
  %179 = vset.pattern.permute.xlu0 0
  %180 = vperm.xlu0 %179, %v162
  %v181 = vpop.permute.xlu0 %180
  %184 = vset.pattern.permute.xlu0 0
  %185 = vperm.xlu0 %184, %v163
  %v186 = vpop.permute.xlu0 %185
  %189 = vset.pattern.permute.xlu0 0
  %190 = vperm.xlu0 %189, %v164
  %v191 = vpop.permute.xlu0 %190
  %194 = vset.pattern.permute.xlu0 0
  %195 = vperm.xlu0 %194, %v165
  %v196 = vpop.permute.xlu0 %195
  %199 = vset.pattern.permute.xlu0 0
  %200 = vperm.xlu0 %199, %v166
  %v201 = vpop.permute.xlu0 %200
  %204 = vset.pattern.permute.xlu0 0
  %205 = vperm.xlu0 %204, %v167
  %v206 = vpop.permute.xlu0 %205
  %v208 = vlaneseq
  %v209 = vshrl.u32 %v208, 7
  %v210 = vsub.s32 1, %v209
  %v211 = vrot.slane %v26, %v210
  %v212 = vmul.f32 %v171, %v211
  %v213 = vmul.f32 %v176, %v211
  %v214 = vmul.f32 %v181, %v211
  %v215 = vmul.f32 %v186, %v211
  %v216 = vmul.f32 %v191, %v211
  %v217 = vmul.f32 %v196, %v211
  %v218 = vmul.f32 %v201, %v211
  %v219 = vmul.f32 %v206, %v211
  %s220 = scalar_lea.vmem %s2, 64
  %v221 = vld [vmem:[%s220] sm:$0xff]
  %v222 = vld [vmem:[%s220 + $0x8] sm:$0xff]
  %v223 = vld [vmem:[%s220 + $0x10] sm:$0xff]
  %v224 = vld [vmem:[%s220 + $0x18] sm:$0xff]
  %v225 = vld [vmem:[%s220 + $0x20] sm:$0xff]
  %v226 = vld [vmem:[%s220 + $0x28] sm:$0xff]
  %v227 = vld [vmem:[%s220 + $0x30] sm:$0xff]
  %v228 = vld [vmem:[%s220 + $0x38] sm:$0xff]
  %230 = vset.pattern.permute.xlu0 0
  %231 = vperm.xlu0 %230, %v221
  %v232 = vpop.permute.xlu0 %231
  %235 = vset.pattern.permute.xlu0 0
  %236 = vperm.xlu0 %235, %v222
  %v237 = vpop.permute.xlu0 %236
  %240 = vset.pattern.permute.xlu0 0
  %241 = vperm.xlu0 %240, %v223
  %v242 = vpop.permute.xlu0 %241
  %245 = vset.pattern.permute.xlu0 0
  %246 = vperm.xlu0 %245, %v224
  %v247 = vpop.permute.xlu0 %246
  %250 = vset.pattern.permute.xlu0 0
  %251 = vperm.xlu0 %250, %v225
  %v252 = vpop.permute.xlu0 %251
  %255 = vset.pattern.permute.xlu0 0
  %256 = vperm.xlu0 %255, %v226
  %v257 = vpop.permute.xlu0 %256
  %260 = vset.pattern.permute.xlu0 0
  %261 = vperm.xlu0 %260, %v227
  %v262 = vpop.permute.xlu0 %261
  %265 = vset.pattern.permute.xlu0 0
  %266 = vperm.xlu0 %265, %v228
  %v267 = vpop.permute.xlu0 %266
  %v269 = vadd.f32 %v212, %v232
  %v270 = vadd.f32 %v213, %v237
  %v271 = vadd.f32 %v214, %v242
  %v272 = vadd.f32 %v215, %v247
  %v273 = vadd.f32 %v216, %v252
  %v274 = vadd.f32 %v217, %v257
  %v275 = vadd.f32 %v218, %v262
  %v276 = vadd.f32 %v219, %v267
  %v277 = vmax.f32 %v269, 0.0
  %v278 = vmax.f32 %v270, 0.0
  %v279 = vmax.f32 %v271, 0.0
  %v280 = vmax.f32 %v272, 0.0
  %v281 = vmax.f32 %v273, 0.0
  %v282 = vmax.f32 %v274, 0.0
  %v283 = vmax.f32 %v275, 0.0
  %v284 = vmax.f32 %v276, 0.0
  %s285 = scalar_lea.vmem %s3, 64
  %v286 = vld [vmem:[%s285] sm:$0xff]
  %v287 = vld [vmem:[%s285 + $0x8] sm:$0xff]
  %v288 = vld [vmem:[%s285 + $0x10] sm:$0xff]
  %v289 = vld [vmem:[%s285 + $0x18] sm:$0xff]
  %v290 = vld [vmem:[%s285 + $0x20] sm:$0xff]
  %v291 = vld [vmem:[%s285 + $0x28] sm:$0xff]
  %v292 = vld [vmem:[%s285 + $0x30] sm:$0xff]
  %v293 = vld [vmem:[%s285 + $0x38] sm:$0xff]
  %vm294 = vcmask 523264
  %v296 = vsel %vm294, %v286, 0
  %v299 = vsel %vm294, %v287, 0
  %v302 = vsel %vm294, %v288, 0
  %v305 = vsel %vm294, %v289, 0
  %v308 = vsel %vm294, %v290, 0
  %v311 = vsel %vm294, %v291, 0
  %v314 = vsel %vm294, %v292, 0
  %v317 = vsel %vm294, %v293, 0
  %319 = vmatprep.subr.mxu0 0.0
  %320 = vmatpush1.msra.mxu0 %v277
  %321 = vmatprep.subr.mxu0 0.0
  %322 = vmatpush1.msra.mxu0 %v278
  %323 = vmatprep.subr.mxu0 0.0
  %324 = vmatpush1.msra.mxu0 %v279
  %325 = vmatprep.subr.mxu0 0.0
  %326 = vmatpush1.msra.mxu0 %v280
  %327 = vmatprep.subr.mxu0 0.0
  %328 = vmatpush1.msra.mxu0 %v281
  %329 = vmatprep.subr.mxu0 0.0
  %330 = vmatpush1.msra.mxu0 %v282
  %331 = vmatprep.subr.mxu0 0.0
  %332 = vmatpush1.msra.mxu0 %v283
  %333 = vmatprep.subr.mxu0 0.0
  %334 = vmatpush1.msra.mxu0 %v284
  %335 = vmatprep.subr.mxu0 0.0
  %336 = vmatpush1.msra.mxu0 0.0
  %337 = vmatprep.subr.mxu0 0.0
  %338 = vmatpush1.msra.mxu0 0.0
  %339 = vmatprep.subr.mxu0 0.0
  %340 = vmatpush1.msra.mxu0 0.0
  %341 = vmatprep.subr.mxu0 0.0
  %342 = vmatpush1.msra.mxu0 0.0
  %343 = vmatprep.subr.mxu0 0.0
  %344 = vmatpush1.msra.mxu0 0.0
  %345 = vmatprep.subr.mxu0 0.0
  %346 = vmatpush1.msra.mxu0 0.0
  %347 = vmatprep.subr.mxu0 0.0
  %348 = vmatpush1.msra.mxu0 0.0
  %349 = vmatprep.subr.mxu0 0.0
  %350 = vmatpush1.msra.mxu0 0.0
  %351 = vmatprep.subr.mxu0 0.0
  %352 = vmatpush1.msra.mxu0 0.0
  %353 = vmatprep.subr.mxu0 0.0
  %354 = vmatpush1.msra.mxu0 0.0
  %355 = vmatprep.subr.mxu0 0.0
  %356 = vmatpush1.msra.mxu0 0.0
  %357 = vmatprep.subr.mxu0 0.0
  %358 = vmatpush1.msra.mxu0 0.0
  %359 = vmatprep.subr.mxu0 0.0
  %360 = vmatpush1.msra.mxu0 0.0
  %361 = vmatprep.subr.mxu0 0.0
  %362 = vmatpush1.msra.mxu0 0.0
  %363 = vmatprep.subr.mxu0 0.0
  %364 = vmatpush1.msra.mxu0 0.0
  %365 = vmatprep.subr.mxu0 0.0
  %366 = vmatpush1.msra.mxu0 0.0
  %367 = vmatprep.subr.mxu0 0.0
  %368 = vmatpush1.msra.mxu0 0.0
  %369 = vmatprep.subr.mxu0 0.0
  %370 = vmatpush1.msra.mxu0 0.0
  %371 = vmatprep.subr.mxu0 0.0
  %372 = vmatpush1.msra.mxu0 0.0
  %373 = vmatprep.subr.mxu0 0.0
  %374 = vmatpush1.msra.mxu0 0.0
  %375 = vmatprep.subr.mxu0 0.0
  %376 = vmatpush1.msra.mxu0 0.0
  %377 = vmatprep.subr.mxu0 0.0
  %378 = vmatpush1.msra.mxu0 0.0
  %379 = vmatprep.subr.mxu0 0.0
  %380 = vmatpush1.msra.mxu0 0.0
  %381 = vmatprep.subr.mxu0 0.0
  %382 = vmatpush1.msra.mxu0 0.0
  %383 = vmatprep.mubr.f32.mxu0 0.0
  %384 = vmatmul.mubr.f32.gmra.mrb[0].mxu0 %v296
  %v385 = vpop.f32.mrb[0].mxu0
  %v386 = vadd.f32 0.0, %v385
  %v387 = vpop.f32.mrb[0].mxu0
  %388 = vmatprep.mubr.f32.mxu0 0.0
  %389 = vmatmul.mubr.f32.gmra.mrb[0].mxu0 %v299
  %v390 = vpop.f32.mrb[0].mxu0
  %v391 = vadd.f32 0.0, %v390
  %v392 = vpop.f32.mrb[0].mxu0
  %393 = vmatprep.mubr.f32.mxu0 0.0
  %394 = vmatmul.mubr.f32.gmra.mrb[0].mxu0 %v302
  %v395 = vpop.f32.mrb[0].mxu0
  %v396 = vadd.f32 0.0, %v395
  %v397 = vpop.f32.mrb[0].mxu0
  %398 = vmatprep.mubr.f32.mxu0 0.0
  %399 = vmatmul.mubr.f32.gmra.mrb[0].mxu0 %v305
  %v400 = vpop.f32.mrb[0].mxu0
  %v401 = vadd.f32 0.0, %v400
  %v402 = vpop.f32.mrb[0].mxu0
  %403 = vmatprep.mubr.f32.mxu0 0.0
  %404 = vmatmul.mubr.f32.gmra.mrb[0].mxu0 %v308
  %v405 = vpop.f32.mrb[0].mxu0
  %v406 = vadd.f32 0.0, %v405
  %v407 = vpop.f32.mrb[0].mxu0
  %408 = vmatprep.mubr.f32.mxu0 0.0
  %409 = vmatmul.mubr.f32.gmra.mrb[0].mxu0 %v311
  %v410 = vpop.f32.mrb[0].mxu0
  %v411 = vadd.f32 0.0, %v410
  %v412 = vpop.f32.mrb[0].mxu0
  %413 = vmatprep.mubr.f32.mxu0 0.0
  %414 = vmatmul.mubr.f32.gmra.mrb[0].mxu0 %v314
  %v415 = vpop.f32.mrb[0].mxu0
  %v416 = vadd.f32 0.0, %v415
  %v417 = vpop.f32.mrb[0].mxu0
  %418 = vmatprep.mubr.f32.mxu0 0.0
  %419 = vmatmul.mubr.f32.gmra.mrb[0].mxu0 %v317
  %v420 = vpop.f32.mrb[0].mxu0
  %v421 = vadd.f32 0.0, %v420
  %v422 = vpop.f32.mrb[0].mxu0
  %423 = vdwg.mxu0
  %v425 = vsel %vm294, %v151, 0
  %v428 = vsel %vm294, %v152, 0
  %v431 = vsel %vm294, %v153, 0
  %v434 = vsel %vm294, %v154, 0
  %v437 = vsel %vm294, %v155, 0
  %v440 = vsel %vm294, %v156, 0
  %v443 = vsel %vm294, %v157, 0
  %v446 = vsel %vm294, %v158, 0
  %448 = vmatprep.subr.mxu0 0.0
  %449 = vmatpush1.msra.mxu0 %v143
  %450 = vmatprep.subr.mxu0 0.0
  %451 = vmatpush1.msra.mxu0 %v144
  %452 = vmatprep.subr.mxu0 0.0
  %453 = vmatpush1.msra.mxu0 %v145
  %454 = vmatprep.subr.mxu0 0.0
  %455 = vmatpush1.msra.mxu0 %v146
  %456 = vmatprep.subr.mxu0 0.0
  %457 = vmatpush1.msra.mxu0 %v147
  %458 = vmatprep.subr.mxu0 0.0
  %459 = vmatpush1.msra.mxu0 %v148
  %460 = vmatprep.subr.mxu0 0.0
  %461 = vmatpush1.msra.mxu0 %v149
  %462 = vmatprep.subr.mxu0 0.0
  %463 = vmatpush1.msra.mxu0 %v150
  %464 = vmatprep.subr.mxu0 0.0
  %465 = vmatpush1.msra.mxu0 0.0
  %466 = vmatprep.subr.mxu0 0.0
  %467 = vmatpush1.msra.mxu0 0.0
  %468 = vmatprep.subr.mxu0 0.0
  %469 = vmatpush1.msra.mxu0 0.0
  %470 = vmatprep.subr.mxu0 0.0
  %471 = vmatpush1.msra.mxu0 0.0
  %472 = vmatprep.subr.mxu0 0.0
  %473 = vmatpush1.msra.mxu0 0.0
  %474 = vmatprep.subr.mxu0 0.0
  %475 = vmatpush1.msra.mxu0 0.0
  %476 = vmatprep.subr.mxu0 0.0
  %477 = vmatpush1.msra.mxu0 0.0
  %478 = vmatprep.subr.mxu0 0.0
  %479 = vmatpush1.msra.mxu0 0.0
  %480 = vmatprep.subr.mxu0 0.0
  %481 = vmatpush1.msra.mxu0 0.0
  %482 = vmatprep.subr.mxu0 0.0
  %483 = vmatpush1.msra.mxu0 0.0
  %484 = vmatprep.subr.mxu0 0.0
  %485 = vmatpush1.msra.mxu0 0.0
  %486 = vmatprep.subr.mxu0 0.0
  %487 = vmatpush1.msra.mxu0 0.0
  %488 = vmatprep.subr.mxu0 0.0
  %489 = vmatpush1.msra.mxu0 0.0
  %490 = vmatprep.subr.mxu0 0.0
  %491 = vmatpush1.msra.mxu0 0.0
  %492 = vmatprep.subr.mxu0 0.0
  %493 = vmatpush1.msra.mxu0 0.0
  %494 = vmatprep.subr.mxu0 0.0
  %495 = vmatpush1.msra.mxu0 0.0
  %496 = vmatprep.subr.mxu0 0.0
  %497 = vmatpush1.msra.mxu0 0.0
  %498 = vmatprep.subr.mxu0 0.0
  %499 = vmatpush1.msra.mxu0 0.0
  %500 = vmatprep.subr.mxu0 0.0
  %501 = vmatpush1.msra.mxu0 0.0
  %502 = vmatprep.subr.mxu0 0.0
  %503 = vmatpush1.msra.mxu0 0.0
  %504 = vmatprep.subr.mxu0 0.0
  %505 = vmatpush1.msra.mxu0 0.0
  %506 = vmatprep.subr.mxu0 0.0
  %507 = vmatpush1.msra.mxu0 0.0
  %508 = vmatprep.subr.mxu0 0.0
  %509 = vmatpush1.msra.mxu0 0.0
  %510 = vmatprep.subr.mxu0 0.0
  %511 = vmatpush1.msra.mxu0 0.0
  %512 = vmatprep.mubr.f32.mxu0 0.0
  %513 = vmatmul.mubr.f32.gmra.mrb[0].mxu0 %v425
  %v514 = vpop.f32.mrb[0].mxu0
  %v515 = vadd.f32 %v386, %v514
  %v516 = vpop.f32.mrb[0].mxu0
  %517 = vmatprep.mubr.f32.mxu0 0.0
  %518 = vmatmul.mubr.f32.gmra.mrb[0].mxu0 %v428
  %v519 = vpop.f32.mrb[0].mxu0
  %v520 = vadd.f32 %v391, %v519
  %v521 = vpop.f32.mrb[0].mxu0
  %522 = vmatprep.mubr.f32.mxu0 0.0
  %523 = vmatmul.mubr.f32.gmra.mrb[0].mxu0 %v431
  %v524 = vpop.f32.mrb[0].mxu0
  %v525 = vadd.f32 %v396, %v524
  %v526 = vpop.f32.mrb[0].mxu0
  %527 = vmatprep.mubr.f32.mxu0 0.0
  %528 = vmatmul.mubr.f32.gmra.mrb[0].mxu0 %v434
  %v529 = vpop.f32.mrb[0].mxu0
  %v530 = vadd.f32 %v401, %v529
  %v531 = vpop.f32.mrb[0].mxu0
  %532 = vmatprep.mubr.f32.mxu0 0.0
  %533 = vmatmul.mubr.f32.gmra.mrb[0].mxu0 %v437
  %v534 = vpop.f32.mrb[0].mxu0
  %v535 = vadd.f32 %v406, %v534
  %v536 = vpop.f32.mrb[0].mxu0
  %537 = vmatprep.mubr.f32.mxu0 0.0
  %538 = vmatmul.mubr.f32.gmra.mrb[0].mxu0 %v440
  %v539 = vpop.f32.mrb[0].mxu0
  %v540 = vadd.f32 %v411, %v539
  %v541 = vpop.f32.mrb[0].mxu0
  %542 = vmatprep.mubr.f32.mxu0 0.0
  %543 = vmatmul.mubr.f32.gmra.mrb[0].mxu0 %v443
  %v544 = vpop.f32.mrb[0].mxu0
  %v545 = vadd.f32 %v416, %v544
  %v546 = vpop.f32.mrb[0].mxu0
  %547 = vmatprep.mubr.f32.mxu0 0.0
  %548 = vmatmul.mubr.f32.gmra.mrb[0].mxu0 %v446
  %v549 = vpop.f32.mrb[0].mxu0
  %v550 = vadd.f32 %v421, %v549
  %v551 = vpop.f32.mrb[0].mxu0
  %552 = vdwg.mxu0
  %s553 = scalar_lea.vmem %s1, 128
  %v554 = vld [vmem:[%s553] sm:$0xff]
  %v555 = vld [vmem:[%s553 + $0x8] sm:$0xff]
  %v556 = vld [vmem:[%s553 + $0x10] sm:$0xff]
  %v557 = vld [vmem:[%s553 + $0x18] sm:$0xff]
  %v558 = vld [vmem:[%s553 + $0x20] sm:$0xff]
  %v559 = vld [vmem:[%s553 + $0x28] sm:$0xff]
  %v560 = vld [vmem:[%s553 + $0x30] sm:$0xff]
  %v561 = vld [vmem:[%s553 + $0x38] sm:$0xff]
  %563 = vset.pattern.permute.xlu0 0
  %564 = vperm.xlu0 %563, %v554
  %v565 = vpop.permute.xlu0 %564
  %568 = vset.pattern.permute.xlu0 0
  %569 = vperm.xlu0 %568, %v555
  %v570 = vpop.permute.xlu0 %569
  %573 = vset.pattern.permute.xlu0 0
  %574 = vperm.xlu0 %573, %v556
  %v575 = vpop.permute.xlu0 %574
  %578 = vset.pattern.permute.xlu0 0
  %579 = vperm.xlu0 %578, %v557
  %v580 = vpop.permute.xlu0 %579
  %583 = vset.pattern.permute.xlu0 0
  %584 = vperm.xlu0 %583, %v558
  %v585 = vpop.permute.xlu0 %584
  %588 = vset.pattern.permute.xlu0 0
  %589 = vperm.xlu0 %588, %v559
  %v590 = vpop.permute.xlu0 %589
  %593 = vset.pattern.permute.xlu0 0
  %594 = vperm.xlu0 %593, %v560
  %v595 = vpop.permute.xlu0 %594
  %598 = vset.pattern.permute.xlu0 0
  %599 = vperm.xlu0 %598, %v561
  %v600 = vpop.permute.xlu0 %599
  %v602 = vlaneseq
  %v603 = vshrl.u32 %v602, 7
  %v604 = vsub.s32 2, %v603
  %v605 = vrot.slane %v26, %v604
  %v606 = vmul.f32 %v565, %v605
  %v607 = vmul.f32 %v570, %v605
  %v608 = vmul.f32 %v575, %v605
  %v609 = vmul.f32 %v580, %v605
  %v610 = vmul.f32 %v585, %v605
  %v611 = vmul.f32 %v590, %v605
  %v612 = vmul.f32 %v595, %v605
  %v613 = vmul.f32 %v600, %v605
  %s614 = scalar_lea.vmem %s2, 128
  %v615 = vld [vmem:[%s614] sm:$0xff]
  %v616 = vld [vmem:[%s614 + $0x8] sm:$0xff]
  %v617 = vld [vmem:[%s614 + $0x10] sm:$0xff]
  %v618 = vld [vmem:[%s614 + $0x18] sm:$0xff]
  %v619 = vld [vmem:[%s614 + $0x20] sm:$0xff]
  %v620 = vld [vmem:[%s614 + $0x28] sm:$0xff]
  %v621 = vld [vmem:[%s614 + $0x30] sm:$0xff]
  %v622 = vld [vmem:[%s614 + $0x38] sm:$0xff]
  %624 = vset.pattern.permute.xlu0 0
  %625 = vperm.xlu0 %624, %v615
  %v626 = vpop.permute.xlu0 %625
  %629 = vset.pattern.permute.xlu0 0
  %630 = vperm.xlu0 %629, %v616
  %v631 = vpop.permute.xlu0 %630
  %634 = vset.pattern.permute.xlu0 0
  %635 = vperm.xlu0 %634, %v617
  %v636 = vpop.permute.xlu0 %635
  %639 = vset.pattern.permute.xlu0 0
  %640 = vperm.xlu0 %639, %v618
  %v641 = vpop.permute.xlu0 %640
  %644 = vset.pattern.permute.xlu0 0
  %645 = vperm.xlu0 %644, %v619
  %v646 = vpop.permute.xlu0 %645
  %649 = vset.pattern.permute.xlu0 0
  %650 = vperm.xlu0 %649, %v620
  %v651 = vpop.permute.xlu0 %650
  %654 = vset.pattern.permute.xlu0 0
  %655 = vperm.xlu0 %654, %v621
  %v656 = vpop.permute.xlu0 %655
  %659 = vset.pattern.permute.xlu0 0
  %660 = vperm.xlu0 %659, %v622
  %v661 = vpop.permute.xlu0 %660
  %v663 = vadd.f32 %v606, %v626
  %v664 = vadd.f32 %v607, %v631
  %v665 = vadd.f32 %v608, %v636
  %v666 = vadd.f32 %v609, %v641
  %v667 = vadd.f32 %v610, %v646
  %v668 = vadd.f32 %v611, %v651
  %v669 = vadd.f32 %v612, %v656
  %v670 = vadd.f32 %v613, %v661
  %v671 = vmax.f32 %v663, 0.0
  %v672 = vmax.f32 %v664, 0.0
  %v673 = vmax.f32 %v665, 0.0
  %v674 = vmax.f32 %v666, 0.0
  %v675 = vmax.f32 %v667, 0.0
  %v676 = vmax.f32 %v668, 0.0
  %v677 = vmax.f32 %v669, 0.0
  %v678 = vmax.f32 %v670, 0.0
  %s679 = scalar_lea.vmem %s3, 128
  %v680 = vld [vmem:[%s679] sm:$0xff]
  %v681 = vld [vmem:[%s679 + $0x8] sm:$0xff]
  %v682 = vld [vmem:[%s679 + $0x10] sm:$0xff]
  %v683 = vld [vmem:[%s679 + $0x18] sm:$0xff]
  %v684 = vld [vmem:[%s679 + $0x20] sm:$0xff]
  %v685 = vld [vmem:[%s679 + $0x28] sm:$0xff]
  %v686 = vld [vmem:[%s679 + $0x30] sm:$0xff]
  %v687 = vld [vmem:[%s679 + $0x38] sm:$0xff]
  %v689 = vsel %vm294, %v680, 0
  %v692 = vsel %vm294, %v681, 0
  %v695 = vsel %vm294, %v682, 0
  %v698 = vsel %vm294, %v683, 0
  %v701 = vsel %vm294, %v684, 0
  %v704 = vsel %vm294, %v685, 0
  %v707 = vsel %vm294, %v686, 0
  %v710 = vsel %vm294, %v687, 0
  %712 = vmatprep.subr.mxu0 0.0
  %713 = vmatpush1.msra.mxu0 %v671
  %714 = vmatprep.subr.mxu0 0.0
  %715 = vmatpush1.msra.mxu0 %v672
  %716 = vmatprep.subr.mxu0 0.0
  %717 = vmatpush1.msra.mxu0 %v673
  %718 = vmatprep.subr.mxu0 0.0
  %719 = vmatpush1.msra.mxu0 %v674
  %720 = vmatprep.subr.mxu0 0.0
  %721 = vmatpush1.msra.mxu0 %v675
  %722 = vmatprep.subr.mxu0 0.0
  %723 = vmatpush1.msra.mxu0 %v676
  %724 = vmatprep.subr.mxu0 0.0
  %725 = vmatpush1.msra.mxu0 %v677
  %726 = vmatprep.subr.mxu0 0.0
  %727 = vmatpush1.msra.mxu0 %v678
  %728 = vmatprep.subr.mxu0 0.0
  %729 = vmatpush1.msra.mxu0 0.0
  %730 = vmatprep.subr.mxu0 0.0
  %731 = vmatpush1.msra.mxu0 0.0
  %732 = vmatprep.subr.mxu0 0.0
  %733 = vmatpush1.msra.mxu0 0.0
  %734 = vmatprep.subr.mxu0 0.0
  %735 = vmatpush1.msra.mxu0 0.0
  %736 = vmatprep.subr.mxu0 0.0
  %737 = vmatpush1.msra.mxu0 0.0
  %738 = vmatprep.subr.mxu0 0.0
  %739 = vmatpush1.msra.mxu0 0.0
  %740 = vmatprep.subr.mxu0 0.0
  %741 = vmatpush1.msra.mxu0 0.0
  %742 = vmatprep.subr.mxu0 0.0
  %743 = vmatpush1.msra.mxu0 0.0
  %744 = vmatprep.subr.mxu0 0.0
  %745 = vmatpush1.msra.mxu0 0.0
  %746 = vmatprep.subr.mxu0 0.0
  %747 = vmatpush1.msra.mxu0 0.0
  %748 = vmatprep.subr.mxu0 0.0
  %749 = vmatpush1.msra.mxu0 0.0
  %750 = vmatprep.subr.mxu0 0.0
  %751 = vmatpush1.msra.mxu0 0.0
  %752 = vmatprep.subr.mxu0 0.0
  %753 = vmatpush1.msra.mxu0 0.0
  %754 = vmatprep.subr.mxu0 0.0
  %755 = vmatpush1.msra.mxu0 0.0
  %756 = vmatprep.subr.mxu0 0.0
  %757 = vmatpush1.msra.mxu0 0.0
  %758 = vmatprep.subr.mxu0 0.0
  %759 = vmatpush1.msra.mxu0 0.0
  %760 = vmatprep.subr.mxu0 0.0
  %761 = vmatpush1.msra.mxu0 0.0
  %762 = vmatprep.subr.mxu0 0.0
  %763 = vmatpush1.msra.mxu0 0.0
  %764 = vmatprep.subr.mxu0 0.0
  %765 = vmatpush1.msra.mxu0 0.0
  %766 = vmatprep.subr.mxu0 0.0
  %767 = vmatpush1.msra.mxu0 0.0
  %768 = vmatprep.subr.mxu0 0.0
  %769 = vmatpush1.msra.mxu0 0.0
  %770 = vmatprep.subr.mxu0 0.0
  %771 = vmatpush1.msra.mxu0 0.0
  %772 = vmatprep.subr.mxu0 0.0
  %773 = vmatpush1.msra.mxu0 0.0
  %774 = vmatprep.subr.mxu0 0.0
  %775 = vmatpush1.msra.mxu0 0.0
  %776 = vmatprep.mubr.f32.mxu0 0.0
  %777 = vmatmul.mubr.f32.gmra.mrb[0].mxu0 %v689
  %v778 = vpop.f32.mrb[0].mxu0
  %v779 = vadd.f32 0.0, %v778
  %v780 = vpop.f32.mrb[0].mxu0
  %781 = vmatprep.mubr.f32.mxu0 0.0
  %782 = vmatmul.mubr.f32.gmra.mrb[0].mxu0 %v692
  %v783 = vpop.f32.mrb[0].mxu0
  %v784 = vadd.f32 0.0, %v783
  %v785 = vpop.f32.mrb[0].mxu0
  %786 = vmatprep.mubr.f32.mxu0 0.0
  %787 = vmatmul.mubr.f32.gmra.mrb[0].mxu0 %v695
  %v788 = vpop.f32.mrb[0].mxu0
  %v789 = vadd.f32 0.0, %v788
  %v790 = vpop.f32.mrb[0].mxu0
  %791 = vmatprep.mubr.f32.mxu0 0.0
  %792 = vmatmul.mubr.f32.gmra.mrb[0].mxu0 %v698
  %v793 = vpop.f32.mrb[0].mxu0
  %v794 = vadd.f32 0.0, %v793
  %v795 = vpop.f32.mrb[0].mxu0
  %796 = vmatprep.mubr.f32.mxu0 0.0
  %797 = vmatmul.mubr.f32.gmra.mrb[0].mxu0 %v701
  %v798 = vpop.f32.mrb[0].mxu0
  %v799 = vadd.f32 0.0, %v798
  %v800 = vpop.f32.mrb[0].mxu0
  %801 = vmatprep.mubr.f32.mxu0 0.0
  %802 = vmatmul.mubr.f32.gmra.mrb[0].mxu0 %v704
  %v803 = vpop.f32.mrb[0].mxu0
  %v804 = vadd.f32 0.0, %v803
  %v805 = vpop.f32.mrb[0].mxu0
  %806 = vmatprep.mubr.f32.mxu0 0.0
  %807 = vmatmul.mubr.f32.gmra.mrb[0].mxu0 %v707
  %v808 = vpop.f32.mrb[0].mxu0
  %v809 = vadd.f32 0.0, %v808
  %v810 = vpop.f32.mrb[0].mxu0
  %811 = vmatprep.mubr.f32.mxu0 0.0
  %812 = vmatmul.mubr.f32.gmra.mrb[0].mxu0 %v710
  %v813 = vpop.f32.mrb[0].mxu0
  %v814 = vadd.f32 0.0, %v813
  %v815 = vpop.f32.mrb[0].mxu0
  %816 = vdwg.mxu0
  %v817 = vadd.f32 %v515, %v779
  %v818 = vadd.f32 %v520, %v784
  %v819 = vadd.f32 %v525, %v789
  %v820 = vadd.f32 %v530, %v794
  %v821 = vadd.f32 %v535, %v799
  %v822 = vadd.f32 %v540, %v804
  %v823 = vadd.f32 %v545, %v809
  %v824 = vadd.f32 %v550, %v814
  %s825 = scalar_lea.vmem %s1, 192
  %v826 = vld [vmem:[%s825] sm:$0xff]
  %v827 = vld [vmem:[%s825 + $0x8] sm:$0xff]
  %v828 = vld [vmem:[%s825 + $0x10] sm:$0xff]
  %v829 = vld [vmem:[%s825 + $0x18] sm:$0xff]
  %v830 = vld [vmem:[%s825 + $0x20] sm:$0xff]
  %v831 = vld [vmem:[%s825 + $0x28] sm:$0xff]
  %v832 = vld [vmem:[%s825 + $0x30] sm:$0xff]
  %v833 = vld [vmem:[%s825 + $0x38] sm:$0xff]
  %835 = vset.pattern.permute.xlu0 0
  %836 = vperm.xlu0 %835, %v826
  %v837 = vpop.permute.xlu0 %836
  %840 = vset.pattern.permute.xlu0 0
  %841 = vperm.xlu0 %840, %v827
  %v842 = vpop.permute.xlu0 %841
  %845 = vset.pattern.permute.xlu0 0
  %846 = vperm.xlu0 %845, %v828
  %v847 = vpop.permute.xlu0 %846
  %850 = vset.pattern.permute.xlu0 0
  %851 = vperm.xlu0 %850, %v829
  %v852 = vpop.permute.xlu0 %851
  %855 = vset.pattern.permute.xlu0 0
  %856 = vperm.xlu0 %855, %v830
  %v857 = vpop.permute.xlu0 %856
  %860 = vset.pattern.permute.xlu0 0
  %861 = vperm.xlu0 %860, %v831
  %v862 = vpop.permute.xlu0 %861
  %865 = vset.pattern.permute.xlu0 0
  %866 = vperm.xlu0 %865, %v832
  %v867 = vpop.permute.xlu0 %866
  %870 = vset.pattern.permute.xlu0 0
  %871 = vperm.xlu0 %870, %v833
  %v872 = vpop.permute.xlu0 %871
  %v874 = vlaneseq
  %v875 = vshrl.u32 %v874, 7
  %v876 = vsub.s32 3, %v875
  %v877 = vrot.slane %v26, %v876
  %v878 = vmul.f32 %v837, %v877
  %v879 = vmul.f32 %v842, %v877
  %v880 = vmul.f32 %v847, %v877
  %v881 = vmul.f32 %v852, %v877
  %v882 = vmul.f32 %v857, %v877
  %v883 = vmul.f32 %v862, %v877
  %v884 = vmul.f32 %v867, %v877
  %v885 = vmul.f32 %v872, %v877
  %s886 = scalar_lea.vmem %s2, 192
  %v887 = vld [vmem:[%s886] sm:$0xff]
  %v888 = vld [vmem:[%s886 + $0x8] sm:$0xff]
  %v889 = vld [vmem:[%s886 + $0x10] sm:$0xff]
  %v890 = vld [vmem:[%s886 + $0x18] sm:$0xff]
  %v891 = vld [vmem:[%s886 + $0x20] sm:$0xff]
  %v892 = vld [vmem:[%s886 + $0x28] sm:$0xff]
  %v893 = vld [vmem:[%s886 + $0x30] sm:$0xff]
  %v894 = vld [vmem:[%s886 + $0x38] sm:$0xff]
  %896 = vset.pattern.permute.xlu0 0
  %897 = vperm.xlu0 %896, %v887
  %v898 = vpop.permute.xlu0 %897
  %901 = vset.pattern.permute.xlu0 0
  %902 = vperm.xlu0 %901, %v888
  %v903 = vpop.permute.xlu0 %902
  %906 = vset.pattern.permute.xlu0 0
  %907 = vperm.xlu0 %906, %v889
  %v908 = vpop.permute.xlu0 %907
  %911 = vset.pattern.permute.xlu0 0
  %912 = vperm.xlu0 %911, %v890
  %v913 = vpop.permute.xlu0 %912
  %916 = vset.pattern.permute.xlu0 0
  %917 = vperm.xlu0 %916, %v891
  %v918 = vpop.permute.xlu0 %917
  %921 = vset.pattern.permute.xlu0 0
  %922 = vperm.xlu0 %921, %v892
  %v923 = vpop.permute.xlu0 %922
  %926 = vset.pattern.permute.xlu0 0
  %927 = vperm.xlu0 %926, %v893
  %v928 = vpop.permute.xlu0 %927
  %931 = vset.pattern.permute.xlu0 0
  %932 = vperm.xlu0 %931, %v894
  %v933 = vpop.permute.xlu0 %932
  %v935 = vadd.f32 %v878, %v898
  %v936 = vadd.f32 %v879, %v903
  %v937 = vadd.f32 %v880, %v908
  %v938 = vadd.f32 %v881, %v913
  %v939 = vadd.f32 %v882, %v918
  %v940 = vadd.f32 %v883, %v923
  %v941 = vadd.f32 %v884, %v928
  %v942 = vadd.f32 %v885, %v933
  %v943 = vmax.f32 %v935, 0.0
  %v944 = vmax.f32 %v936, 0.0
  %v945 = vmax.f32 %v937, 0.0
  %v946 = vmax.f32 %v938, 0.0
  %v947 = vmax.f32 %v939, 0.0
  %v948 = vmax.f32 %v940, 0.0
  %v949 = vmax.f32 %v941, 0.0
  %v950 = vmax.f32 %v942, 0.0
  %s951 = scalar_lea.vmem %s3, 192
  %v952 = vld [vmem:[%s951] sm:$0xff]
  %v953 = vld [vmem:[%s951 + $0x8] sm:$0xff]
  %v954 = vld [vmem:[%s951 + $0x10] sm:$0xff]
  %v955 = vld [vmem:[%s951 + $0x18] sm:$0xff]
  %v956 = vld [vmem:[%s951 + $0x20] sm:$0xff]
  %v957 = vld [vmem:[%s951 + $0x28] sm:$0xff]
  %v958 = vld [vmem:[%s951 + $0x30] sm:$0xff]
  %v959 = vld [vmem:[%s951 + $0x38] sm:$0xff]
  %v961 = vsel %vm294, %v952, 0
  %v964 = vsel %vm294, %v953, 0
  %v967 = vsel %vm294, %v954, 0
  %v970 = vsel %vm294, %v955, 0
  %v973 = vsel %vm294, %v956, 0
  %v976 = vsel %vm294, %v957, 0
  %v979 = vsel %vm294, %v958, 0
  %v982 = vsel %vm294, %v959, 0
  %984 = vmatprep.subr.mxu0 0.0
  %985 = vmatpush1.msra.mxu0 %v943
  %986 = vmatprep.subr.mxu0 0.0
  %987 = vmatpush1.msra.mxu0 %v944
  %988 = vmatprep.subr.mxu0 0.0
  %989 = vmatpush1.msra.mxu0 %v945
  %990 = vmatprep.subr.mxu0 0.0
  %991 = vmatpush1.msra.mxu0 %v946
  %992 = vmatprep.subr.mxu0 0.0
  %993 = vmatpush1.msra.mxu0 %v947
  %994 = vmatprep.subr.mxu0 0.0
  %995 = vmatpush1.msra.mxu0 %v948
  %996 = vmatprep.subr.mxu0 0.0
  %997 = vmatpush1.msra.mxu0 %v949
  %998 = vmatprep.subr.mxu0 0.0
  %999 = vmatpush1.msra.mxu0 %v950
  %1000 = vmatprep.subr.mxu0 0.0
  %1001 = vmatpush1.msra.mxu0 0.0
  %1002 = vmatprep.subr.mxu0 0.0
  %1003 = vmatpush1.msra.mxu0 0.0
  %1004 = vmatprep.subr.mxu0 0.0
  %1005 = vmatpush1.msra.mxu0 0.0
  %1006 = vmatprep.subr.mxu0 0.0
  %1007 = vmatpush1.msra.mxu0 0.0
  %1008 = vmatprep.subr.mxu0 0.0
  %1009 = vmatpush1.msra.mxu0 0.0
  %1010 = vmatprep.subr.mxu0 0.0
  %1011 = vmatpush1.msra.mxu0 0.0
  %1012 = vmatprep.subr.mxu0 0.0
  %1013 = vmatpush1.msra.mxu0 0.0
  %1014 = vmatprep.subr.mxu0 0.0
  %1015 = vmatpush1.msra.mxu0 0.0
  %1016 = vmatprep.subr.mxu0 0.0
  %1017 = vmatpush1.msra.mxu0 0.0
  %1018 = vmatprep.subr.mxu0 0.0
  %1019 = vmatpush1.msra.mxu0 0.0
  %1020 = vmatprep.subr.mxu0 0.0
  %1021 = vmatpush1.msra.mxu0 0.0
  %1022 = vmatprep.subr.mxu0 0.0
  %1023 = vmatpush1.msra.mxu0 0.0
  %1024 = vmatprep.subr.mxu0 0.0
  %1025 = vmatpush1.msra.mxu0 0.0
  %1026 = vmatprep.subr.mxu0 0.0
  %1027 = vmatpush1.msra.mxu0 0.0
  %1028 = vmatprep.subr.mxu0 0.0
  %1029 = vmatpush1.msra.mxu0 0.0
  %1030 = vmatprep.subr.mxu0 0.0
  %1031 = vmatpush1.msra.mxu0 0.0
  %1032 = vmatprep.subr.mxu0 0.0
  %1033 = vmatpush1.msra.mxu0 0.0
  %1034 = vmatprep.subr.mxu0 0.0
  %1035 = vmatpush1.msra.mxu0 0.0
  %1036 = vmatprep.subr.mxu0 0.0
  %1037 = vmatpush1.msra.mxu0 0.0
  %1038 = vmatprep.subr.mxu0 0.0
  %1039 = vmatpush1.msra.mxu0 0.0
  %1040 = vmatprep.subr.mxu0 0.0
  %1041 = vmatpush1.msra.mxu0 0.0
  %1042 = vmatprep.subr.mxu0 0.0
  %1043 = vmatpush1.msra.mxu0 0.0
  %1044 = vmatprep.subr.mxu0 0.0
  %1045 = vmatpush1.msra.mxu0 0.0
  %1046 = vmatprep.subr.mxu0 0.0
  %1047 = vmatpush1.msra.mxu0 0.0
  %1048 = vmatprep.mubr.f32.mxu0 0.0
  %1049 = vmatmul.mubr.f32.gmra.mrb[0].mxu0 %v961
  %v1050 = vpop.f32.mrb[0].mxu0
  %v1051 = vadd.f32 0.0, %v1050
  %v1052 = vpop.f32.mrb[0].mxu0
  %1053 = vmatprep.mubr.f32.mxu0 0.0
  %1054 = vmatmul.mubr.f32.gmra.mrb[0].mxu0 %v964
  %v1055 = vpop.f32.mrb[0].mxu0
  %v1056 = vadd.f32 0.0, %v1055
  %v1057 = vpop.f32.mrb[0].mxu0
  %1058 = vmatprep.mubr.f32.mxu0 0.0
  %1059 = vmatmul.mubr.f32.gmra.mrb[0].mxu0 %v967
  %v1060 = vpop.f32.mrb[0].mxu0
  %v1061 = vadd.f32 0.0, %v1060
  %v1062 = vpop.f32.mrb[0].mxu0
  %1063 = vmatprep.mubr.f32.mxu0 0.0
  %1064 = vmatmul.mubr.f32.gmra.mrb[0].mxu0 %v970
  %v1065 = vpop.f32.mrb[0].mxu0
  %v1066 = vadd.f32 0.0, %v1065
  %v1067 = vpop.f32.mrb[0].mxu0
  %1068 = vmatprep.mubr.f32.mxu0 0.0
  %1069 = vmatmul.mubr.f32.gmra.mrb[0].mxu0 %v973
  %v1070 = vpop.f32.mrb[0].mxu0
  %v1071 = vadd.f32 0.0, %v1070
  %v1072 = vpop.f32.mrb[0].mxu0
  %1073 = vmatprep.mubr.f32.mxu0 0.0
  %1074 = vmatmul.mubr.f32.gmra.mrb[0].mxu0 %v976
  %v1075 = vpop.f32.mrb[0].mxu0
  %v1076 = vadd.f32 0.0, %v1075
  %v1077 = vpop.f32.mrb[0].mxu0
  %1078 = vmatprep.mubr.f32.mxu0 0.0
  %1079 = vmatmul.mubr.f32.gmra.mrb[0].mxu0 %v979
  %v1080 = vpop.f32.mrb[0].mxu0
  %v1081 = vadd.f32 0.0, %v1080
  %v1082 = vpop.f32.mrb[0].mxu0
  %1083 = vmatprep.mubr.f32.mxu0 0.0
  %1084 = vmatmul.mubr.f32.gmra.mrb[0].mxu0 %v982
  %v1085 = vpop.f32.mrb[0].mxu0
  %v1086 = vadd.f32 0.0, %v1085
  %v1087 = vpop.f32.mrb[0].mxu0
  %1088 = vdwg.mxu0
  %v1089 = vadd.f32 %v817, %v1051
  %v1090 = vadd.f32 %v818, %v1056
  %v1091 = vadd.f32 %v819, %v1061
  %v1092 = vadd.f32 %v820, %v1066
  %v1093 = vadd.f32 %v821, %v1071
  %v1094 = vadd.f32 %v822, %v1076
  %v1095 = vadd.f32 %v823, %v1081
  %v1096 = vadd.f32 %v824, %v1086
  %s1097 = scalar_lea.vmem %s1, 256
  %v1098 = vld [vmem:[%s1097] sm:$0xff]
  %v1099 = vld [vmem:[%s1097 + $0x8] sm:$0xff]
  %v1100 = vld [vmem:[%s1097 + $0x10] sm:$0xff]
  %v1101 = vld [vmem:[%s1097 + $0x18] sm:$0xff]
  %v1102 = vld [vmem:[%s1097 + $0x20] sm:$0xff]
  %v1103 = vld [vmem:[%s1097 + $0x28] sm:$0xff]
  %v1104 = vld [vmem:[%s1097 + $0x30] sm:$0xff]
  %v1105 = vld [vmem:[%s1097 + $0x38] sm:$0xff]
  %1107 = vset.pattern.permute.xlu0 0
  %1108 = vperm.xlu0 %1107, %v1098
  %v1109 = vpop.permute.xlu0 %1108
  %1112 = vset.pattern.permute.xlu0 0
  %1113 = vperm.xlu0 %1112, %v1099
  %v1114 = vpop.permute.xlu0 %1113
  %1117 = vset.pattern.permute.xlu0 0
  %1118 = vperm.xlu0 %1117, %v1100
  %v1119 = vpop.permute.xlu0 %1118
  %1122 = vset.pattern.permute.xlu0 0
  %1123 = vperm.xlu0 %1122, %v1101
  %v1124 = vpop.permute.xlu0 %1123
  %1127 = vset.pattern.permute.xlu0 0
  %1128 = vperm.xlu0 %1127, %v1102
  %v1129 = vpop.permute.xlu0 %1128
  %1132 = vset.pattern.permute.xlu0 0
  %1133 = vperm.xlu0 %1132, %v1103
  %v1134 = vpop.permute.xlu0 %1133
  %1137 = vset.pattern.permute.xlu0 0
  %1138 = vperm.xlu0 %1137, %v1104
  %v1139 = vpop.permute.xlu0 %1138
  %1142 = vset.pattern.permute.xlu0 0
  %1143 = vperm.xlu0 %1142, %v1105
  %v1144 = vpop.permute.xlu0 %1143
  %v1146 = vlaneseq
  %v1147 = vshrl.u32 %v1146, 7
  %v1148 = vsub.s32 4, %v1147
  %v1149 = vrot.slane %v26, %v1148
  %v1150 = vmul.f32 %v1109, %v1149
  %v1151 = vmul.f32 %v1114, %v1149
  %v1152 = vmul.f32 %v1119, %v1149
  %v1153 = vmul.f32 %v1124, %v1149
  %v1154 = vmul.f32 %v1129, %v1149
  %v1155 = vmul.f32 %v1134, %v1149
  %v1156 = vmul.f32 %v1139, %v1149
  %v1157 = vmul.f32 %v1144, %v1149
  %s1158 = scalar_lea.vmem %s2, 256
  %v1159 = vld [vmem:[%s1158] sm:$0xff]
  %v1160 = vld [vmem:[%s1158 + $0x8] sm:$0xff]
  %v1161 = vld [vmem:[%s1158 + $0x10] sm:$0xff]
  %v1162 = vld [vmem:[%s1158 + $0x18] sm:$0xff]
  %v1163 = vld [vmem:[%s1158 + $0x20] sm:$0xff]
  %v1164 = vld [vmem:[%s1158 + $0x28] sm:$0xff]
  %v1165 = vld [vmem:[%s1158 + $0x30] sm:$0xff]
  %v1166 = vld [vmem:[%s1158 + $0x38] sm:$0xff]
  %1168 = vset.pattern.permute.xlu0 0
  %1169 = vperm.xlu0 %1168, %v1159
  %v1170 = vpop.permute.xlu0 %1169
  %1173 = vset.pattern.permute.xlu0 0
  %1174 = vperm.xlu0 %1173, %v1160
  %v1175 = vpop.permute.xlu0 %1174
  %1178 = vset.pattern.permute.xlu0 0
  %1179 = vperm.xlu0 %1178, %v1161
  %v1180 = vpop.permute.xlu0 %1179
  %1183 = vset.pattern.permute.xlu0 0
  %1184 = vperm.xlu0 %1183, %v1162
  %v1185 = vpop.permute.xlu0 %1184
  %1188 = vset.pattern.permute.xlu0 0
  %1189 = vperm.xlu0 %1188, %v1163
  %v1190 = vpop.permute.xlu0 %1189
  %1193 = vset.pattern.permute.xlu0 0
  %1194 = vperm.xlu0 %1193, %v1164
  %v1195 = vpop.permute.xlu0 %1194
  %1198 = vset.pattern.permute.xlu0 0
  %1199 = vperm.xlu0 %1198, %v1165
  %v1200 = vpop.permute.xlu0 %1199
  %1203 = vset.pattern.permute.xlu0 0
  %1204 = vperm.xlu0 %1203, %v1166
  %v1205 = vpop.permute.xlu0 %1204
  %v1207 = vadd.f32 %v1150, %v1170
  %v1208 = vadd.f32 %v1151, %v1175
  %v1209 = vadd.f32 %v1152, %v1180
  %v1210 = vadd.f32 %v1153, %v1185
  %v1211 = vadd.f32 %v1154, %v1190
  %v1212 = vadd.f32 %v1155, %v1195
  %v1213 = vadd.f32 %v1156, %v1200
  %v1214 = vadd.f32 %v1157, %v1205
  %v1215 = vmax.f32 %v1207, 0.0
  %v1216 = vmax.f32 %v1208, 0.0
  %v1217 = vmax.f32 %v1209, 0.0
  %v1218 = vmax.f32 %v1210, 0.0
  %v1219 = vmax.f32 %v1211, 0.0
  %v1220 = vmax.f32 %v1212, 0.0
  %v1221 = vmax.f32 %v1213, 0.0
  %v1222 = vmax.f32 %v1214, 0.0
  %s1223 = scalar_lea.vmem %s3, 256
  %v1224 = vld [vmem:[%s1223] sm:$0xff]
  %v1225 = vld [vmem:[%s1223 + $0x8] sm:$0xff]
  %v1226 = vld [vmem:[%s1223 + $0x10] sm:$0xff]
  %v1227 = vld [vmem:[%s1223 + $0x18] sm:$0xff]
  %v1228 = vld [vmem:[%s1223 + $0x20] sm:$0xff]
  %v1229 = vld [vmem:[%s1223 + $0x28] sm:$0xff]
  %v1230 = vld [vmem:[%s1223 + $0x30] sm:$0xff]
  %v1231 = vld [vmem:[%s1223 + $0x38] sm:$0xff]
  %v1233 = vsel %vm294, %v1224, 0
  %v1236 = vsel %vm294, %v1225, 0
  %v1239 = vsel %vm294, %v1226, 0
  %v1242 = vsel %vm294, %v1227, 0
  %v1245 = vsel %vm294, %v1228, 0
  %v1248 = vsel %vm294, %v1229, 0
  %v1251 = vsel %vm294, %v1230, 0
  %v1254 = vsel %vm294, %v1231, 0
  %1256 = vmatprep.subr.mxu0 0.0
  %1257 = vmatpush1.msra.mxu0 %v1215
  %1258 = vmatprep.subr.mxu0 0.0
  %1259 = vmatpush1.msra.mxu0 %v1216
  %1260 = vmatprep.subr.mxu0 0.0
  %1261 = vmatpush1.msra.mxu0 %v1217
  %1262 = vmatprep.subr.mxu0 0.0
  %1263 = vmatpush1.msra.mxu0 %v1218
  %1264 = vmatprep.subr.mxu0 0.0
  %1265 = vmatpush1.msra.mxu0 %v1219
  %1266 = vmatprep.subr.mxu0 0.0
  %1267 = vmatpush1.msra.mxu0 %v1220
  %1268 = vmatprep.subr.mxu0 0.0
  %1269 = vmatpush1.msra.mxu0 %v1221
  %1270 = vmatprep.subr.mxu0 0.0
  %1271 = vmatpush1.msra.mxu0 %v1222
  %1272 = vmatprep.subr.mxu0 0.0
  %1273 = vmatpush1.msra.mxu0 0.0
  %1274 = vmatprep.subr.mxu0 0.0
  %1275 = vmatpush1.msra.mxu0 0.0
  %1276 = vmatprep.subr.mxu0 0.0
  %1277 = vmatpush1.msra.mxu0 0.0
  %1278 = vmatprep.subr.mxu0 0.0
  %1279 = vmatpush1.msra.mxu0 0.0
  %1280 = vmatprep.subr.mxu0 0.0
  %1281 = vmatpush1.msra.mxu0 0.0
  %1282 = vmatprep.subr.mxu0 0.0
  %1283 = vmatpush1.msra.mxu0 0.0
  %1284 = vmatprep.subr.mxu0 0.0
  %1285 = vmatpush1.msra.mxu0 0.0
  %1286 = vmatprep.subr.mxu0 0.0
  %1287 = vmatpush1.msra.mxu0 0.0
  %1288 = vmatprep.subr.mxu0 0.0
  %1289 = vmatpush1.msra.mxu0 0.0
  %1290 = vmatprep.subr.mxu0 0.0
  %1291 = vmatpush1.msra.mxu0 0.0
  %1292 = vmatprep.subr.mxu0 0.0
  %1293 = vmatpush1.msra.mxu0 0.0
  %1294 = vmatprep.subr.mxu0 0.0
  %1295 = vmatpush1.msra.mxu0 0.0
  %1296 = vmatprep.subr.mxu0 0.0
  %1297 = vmatpush1.msra.mxu0 0.0
  %1298 = vmatprep.subr.mxu0 0.0
  %1299 = vmatpush1.msra.mxu0 0.0
  %1300 = vmatprep.subr.mxu0 0.0
  %1301 = vmatpush1.msra.mxu0 0.0
  %1302 = vmatprep.subr.mxu0 0.0
  %1303 = vmatpush1.msra.mxu0 0.0
  %1304 = vmatprep.subr.mxu0 0.0
  %1305 = vmatpush1.msra.mxu0 0.0
  %1306 = vmatprep.subr.mxu0 0.0
  %1307 = vmatpush1.msra.mxu0 0.0
  %1308 = vmatprep.subr.mxu0 0.0
  %1309 = vmatpush1.msra.mxu0 0.0
  %1310 = vmatprep.subr.mxu0 0.0
  %1311 = vmatpush1.msra.mxu0 0.0
  %1312 = vmatprep.subr.mxu0 0.0
  %1313 = vmatpush1.msra.mxu0 0.0
  %1314 = vmatprep.subr.mxu0 0.0
  %1315 = vmatpush1.msra.mxu0 0.0
  %1316 = vmatprep.subr.mxu0 0.0
  %1317 = vmatpush1.msra.mxu0 0.0
  %1318 = vmatprep.subr.mxu0 0.0
  %1319 = vmatpush1.msra.mxu0 0.0
  %1320 = vmatprep.mubr.f32.mxu0 0.0
  %1321 = vmatmul.mubr.f32.gmra.mrb[0].mxu0 %v1233
  %v1322 = vpop.f32.mrb[0].mxu0
  %v1323 = vadd.f32 0.0, %v1322
  %v1324 = vpop.f32.mrb[0].mxu0
  %1325 = vmatprep.mubr.f32.mxu0 0.0
  %1326 = vmatmul.mubr.f32.gmra.mrb[0].mxu0 %v1236
  %v1327 = vpop.f32.mrb[0].mxu0
  %v1328 = vadd.f32 0.0, %v1327
  %v1329 = vpop.f32.mrb[0].mxu0
  %1330 = vmatprep.mubr.f32.mxu0 0.0
  %1331 = vmatmul.mubr.f32.gmra.mrb[0].mxu0 %v1239
  %v1332 = vpop.f32.mrb[0].mxu0
  %v1333 = vadd.f32 0.0, %v1332
  %v1334 = vpop.f32.mrb[0].mxu0
  %1335 = vmatprep.mubr.f32.mxu0 0.0
  %1336 = vmatmul.mubr.f32.gmra.mrb[0].mxu0 %v1242
  %v1337 = vpop.f32.mrb[0].mxu0
  %v1338 = vadd.f32 0.0, %v1337
  %v1339 = vpop.f32.mrb[0].mxu0
  %1340 = vmatprep.mubr.f32.mxu0 0.0
  %1341 = vmatmul.mubr.f32.gmra.mrb[0].mxu0 %v1245
  %v1342 = vpop.f32.mrb[0].mxu0
  %v1343 = vadd.f32 0.0, %v1342
  %v1344 = vpop.f32.mrb[0].mxu0
  %1345 = vmatprep.mubr.f32.mxu0 0.0
  %1346 = vmatmul.mubr.f32.gmra.mrb[0].mxu0 %v1248
  %v1347 = vpop.f32.mrb[0].mxu0
  %v1348 = vadd.f32 0.0, %v1347
  %v1349 = vpop.f32.mrb[0].mxu0
  %1350 = vmatprep.mubr.f32.mxu0 0.0
  %1351 = vmatmul.mubr.f32.gmra.mrb[0].mxu0 %v1251
  %v1352 = vpop.f32.mrb[0].mxu0
  %v1353 = vadd.f32 0.0, %v1352
  %v1354 = vpop.f32.mrb[0].mxu0
  %1355 = vmatprep.mubr.f32.mxu0 0.0
  %1356 = vmatmul.mubr.f32.gmra.mrb[0].mxu0 %v1254
  %v1357 = vpop.f32.mrb[0].mxu0
  %v1358 = vadd.f32 0.0, %v1357
  %v1359 = vpop.f32.mrb[0].mxu0
  %1360 = vdwg.mxu0
  %v1361 = vadd.f32 %v1089, %v1323
  %v1362 = vadd.f32 %v1090, %v1328
  %v1363 = vadd.f32 %v1091, %v1333
  %v1364 = vadd.f32 %v1092, %v1338
  %v1365 = vadd.f32 %v1093, %v1343
  %v1366 = vadd.f32 %v1094, %v1348
  %v1367 = vadd.f32 %v1095, %v1353
  %v1368 = vadd.f32 %v1096, %v1358
  %s1369 = scalar_lea.vmem %s1, 320
  %v1370 = vld [vmem:[%s1369] sm:$0xff]
  %v1371 = vld [vmem:[%s1369 + $0x8] sm:$0xff]
  %v1372 = vld [vmem:[%s1369 + $0x10] sm:$0xff]
  %v1373 = vld [vmem:[%s1369 + $0x18] sm:$0xff]
  %v1374 = vld [vmem:[%s1369 + $0x20] sm:$0xff]
  %v1375 = vld [vmem:[%s1369 + $0x28] sm:$0xff]
  %v1376 = vld [vmem:[%s1369 + $0x30] sm:$0xff]
  %v1377 = vld [vmem:[%s1369 + $0x38] sm:$0xff]
  %1379 = vset.pattern.permute.xlu0 0
  %1380 = vperm.xlu0 %1379, %v1370
  %v1381 = vpop.permute.xlu0 %1380
  %1384 = vset.pattern.permute.xlu0 0
  %1385 = vperm.xlu0 %1384, %v1371
  %v1386 = vpop.permute.xlu0 %1385
  %1389 = vset.pattern.permute.xlu0 0
  %1390 = vperm.xlu0 %1389, %v1372
  %v1391 = vpop.permute.xlu0 %1390
  %1394 = vset.pattern.permute.xlu0 0
  %1395 = vperm.xlu0 %1394, %v1373
  %v1396 = vpop.permute.xlu0 %1395
  %1399 = vset.pattern.permute.xlu0 0
  %1400 = vperm.xlu0 %1399, %v1374
  %v1401 = vpop.permute.xlu0 %1400
  %1404 = vset.pattern.permute.xlu0 0
  %1405 = vperm.xlu0 %1404, %v1375
  %v1406 = vpop.permute.xlu0 %1405
  %1409 = vset.pattern.permute.xlu0 0
  %1410 = vperm.xlu0 %1409, %v1376
  %v1411 = vpop.permute.xlu0 %1410
  %1414 = vset.pattern.permute.xlu0 0
  %1415 = vperm.xlu0 %1414, %v1377
  %v1416 = vpop.permute.xlu0 %1415
  %v1418 = vlaneseq
  %v1419 = vshrl.u32 %v1418, 7
  %v1420 = vsub.s32 5, %v1419
  %v1421 = vrot.slane %v26, %v1420
  %v1422 = vmul.f32 %v1381, %v1421
  %v1423 = vmul.f32 %v1386, %v1421
  %v1424 = vmul.f32 %v1391, %v1421
  %v1425 = vmul.f32 %v1396, %v1421
  %v1426 = vmul.f32 %v1401, %v1421
  %v1427 = vmul.f32 %v1406, %v1421
  %v1428 = vmul.f32 %v1411, %v1421
  %v1429 = vmul.f32 %v1416, %v1421
  %s1430 = scalar_lea.vmem %s2, 320
  %v1431 = vld [vmem:[%s1430] sm:$0xff]
  %v1432 = vld [vmem:[%s1430 + $0x8] sm:$0xff]
  %v1433 = vld [vmem:[%s1430 + $0x10] sm:$0xff]
  %v1434 = vld [vmem:[%s1430 + $0x18] sm:$0xff]
  %v1435 = vld [vmem:[%s1430 + $0x20] sm:$0xff]
  %v1436 = vld [vmem:[%s1430 + $0x28] sm:$0xff]
  %v1437 = vld [vmem:[%s1430 + $0x30] sm:$0xff]
  %v1438 = vld [vmem:[%s1430 + $0x38] sm:$0xff]
  %1440 = vset.pattern.permute.xlu0 0
  %1441 = vperm.xlu0 %1440, %v1431
  %v1442 = vpop.permute.xlu0 %1441
  %1445 = vset.pattern.permute.xlu0 0
  %1446 = vperm.xlu0 %1445, %v1432
  %v1447 = vpop.permute.xlu0 %1446
  %1450 = vset.pattern.permute.xlu0 0
  %1451 = vperm.xlu0 %1450, %v1433
  %v1452 = vpop.permute.xlu0 %1451
  %1455 = vset.pattern.permute.xlu0 0
  %1456 = vperm.xlu0 %1455, %v1434
  %v1457 = vpop.permute.xlu0 %1456
  %1460 = vset.pattern.permute.xlu0 0
  %1461 = vperm.xlu0 %1460, %v1435
  %v1462 = vpop.permute.xlu0 %1461
  %1465 = vset.pattern.permute.xlu0 0
  %1466 = vperm.xlu0 %1465, %v1436
  %v1467 = vpop.permute.xlu0 %1466
  %1470 = vset.pattern.permute.xlu0 0
  %1471 = vperm.xlu0 %1470, %v1437
  %v1472 = vpop.permute.xlu0 %1471
  %1475 = vset.pattern.permute.xlu0 0
  %1476 = vperm.xlu0 %1475, %v1438
  %v1477 = vpop.permute.xlu0 %1476
  %v1479 = vadd.f32 %v1422, %v1442
  %v1480 = vadd.f32 %v1423, %v1447
  %v1481 = vadd.f32 %v1424, %v1452
  %v1482 = vadd.f32 %v1425, %v1457
  %v1483 = vadd.f32 %v1426, %v1462
  %v1484 = vadd.f32 %v1427, %v1467
  %v1485 = vadd.f32 %v1428, %v1472
  %v1486 = vadd.f32 %v1429, %v1477
  %v1487 = vmax.f32 %v1479, 0.0
  %v1488 = vmax.f32 %v1480, 0.0
  %v1489 = vmax.f32 %v1481, 0.0
  %v1490 = vmax.f32 %v1482, 0.0
  %v1491 = vmax.f32 %v1483, 0.0
  %v1492 = vmax.f32 %v1484, 0.0
  %v1493 = vmax.f32 %v1485, 0.0
  %v1494 = vmax.f32 %v1486, 0.0
  %s1495 = scalar_lea.vmem %s3, 320
  %v1496 = vld [vmem:[%s1495] sm:$0xff]
  %v1497 = vld [vmem:[%s1495 + $0x8] sm:$0xff]
  %v1498 = vld [vmem:[%s1495 + $0x10] sm:$0xff]
  %v1499 = vld [vmem:[%s1495 + $0x18] sm:$0xff]
  %v1500 = vld [vmem:[%s1495 + $0x20] sm:$0xff]
  %v1501 = vld [vmem:[%s1495 + $0x28] sm:$0xff]
  %v1502 = vld [vmem:[%s1495 + $0x30] sm:$0xff]
  %v1503 = vld [vmem:[%s1495 + $0x38] sm:$0xff]
  %v1505 = vsel %vm294, %v1496, 0
  %v1508 = vsel %vm294, %v1497, 0
  %v1511 = vsel %vm294, %v1498, 0
  %v1514 = vsel %vm294, %v1499, 0
  %v1517 = vsel %vm294, %v1500, 0
  %v1520 = vsel %vm294, %v1501, 0
  %v1523 = vsel %vm294, %v1502, 0
  %v1526 = vsel %vm294, %v1503, 0
  %1528 = vmatprep.subr.mxu0 0.0
  %1529 = vmatpush1.msra.mxu0 %v1487
  %1530 = vmatprep.subr.mxu0 0.0
  %1531 = vmatpush1.msra.mxu0 %v1488
  %1532 = vmatprep.subr.mxu0 0.0
  %1533 = vmatpush1.msra.mxu0 %v1489
  %1534 = vmatprep.subr.mxu0 0.0
  %1535 = vmatpush1.msra.mxu0 %v1490
  %1536 = vmatprep.subr.mxu0 0.0
  %1537 = vmatpush1.msra.mxu0 %v1491
  %1538 = vmatprep.subr.mxu0 0.0
  %1539 = vmatpush1.msra.mxu0 %v1492
  %1540 = vmatprep.subr.mxu0 0.0
  %1541 = vmatpush1.msra.mxu0 %v1493
  %1542 = vmatprep.subr.mxu0 0.0
  %1543 = vmatpush1.msra.mxu0 %v1494
  %1544 = vmatprep.subr.mxu0 0.0
  %1545 = vmatpush1.msra.mxu0 0.0
  %1546 = vmatprep.subr.mxu0 0.0
  %1547 = vmatpush1.msra.mxu0 0.0
  %1548 = vmatprep.subr.mxu0 0.0
  %1549 = vmatpush1.msra.mxu0 0.0
  %1550 = vmatprep.subr.mxu0 0.0
  %1551 = vmatpush1.msra.mxu0 0.0
  %1552 = vmatprep.subr.mxu0 0.0
  %1553 = vmatpush1.msra.mxu0 0.0
  %1554 = vmatprep.subr.mxu0 0.0
  %1555 = vmatpush1.msra.mxu0 0.0
  %1556 = vmatprep.subr.mxu0 0.0
  %1557 = vmatpush1.msra.mxu0 0.0
  %1558 = vmatprep.subr.mxu0 0.0
  %1559 = vmatpush1.msra.mxu0 0.0
  %1560 = vmatprep.subr.mxu0 0.0
  %1561 = vmatpush1.msra.mxu0 0.0
  %1562 = vmatprep.subr.mxu0 0.0
  %1563 = vmatpush1.msra.mxu0 0.0
  %1564 = vmatprep.subr.mxu0 0.0
  %1565 = vmatpush1.msra.mxu0 0.0
  %1566 = vmatprep.subr.mxu0 0.0
  %1567 = vmatpush1.msra.mxu0 0.0
  %1568 = vmatprep.subr.mxu0 0.0
  %1569 = vmatpush1.msra.mxu0 0.0
  %1570 = vmatprep.subr.mxu0 0.0
  %1571 = vmatpush1.msra.mxu0 0.0
  %1572 = vmatprep.subr.mxu0 0.0
  %1573 = vmatpush1.msra.mxu0 0.0
  %1574 = vmatprep.subr.mxu0 0.0
  %1575 = vmatpush1.msra.mxu0 0.0
  %1576 = vmatprep.subr.mxu0 0.0
  %1577 = vmatpush1.msra.mxu0 0.0
  %1578 = vmatprep.subr.mxu0 0.0
  %1579 = vmatpush1.msra.mxu0 0.0
  %1580 = vmatprep.subr.mxu0 0.0
  %1581 = vmatpush1.msra.mxu0 0.0
  %1582 = vmatprep.subr.mxu0 0.0
  %1583 = vmatpush1.msra.mxu0 0.0
  %1584 = vmatprep.subr.mxu0 0.0
  %1585 = vmatpush1.msra.mxu0 0.0
  %1586 = vmatprep.subr.mxu0 0.0
  %1587 = vmatpush1.msra.mxu0 0.0
  %1588 = vmatprep.subr.mxu0 0.0
  %1589 = vmatpush1.msra.mxu0 0.0
  %1590 = vmatprep.subr.mxu0 0.0
  %1591 = vmatpush1.msra.mxu0 0.0
  %1592 = vmatprep.mubr.f32.mxu0 0.0
  %1593 = vmatmul.mubr.f32.gmra.mrb[0].mxu0 %v1505
  %v1594 = vpop.f32.mrb[0].mxu0
  %v1595 = vadd.f32 0.0, %v1594
  %v1596 = vpop.f32.mrb[0].mxu0
  %1597 = vmatprep.mubr.f32.mxu0 0.0
  %1598 = vmatmul.mubr.f32.gmra.mrb[0].mxu0 %v1508
  %v1599 = vpop.f32.mrb[0].mxu0
  %v1600 = vadd.f32 0.0, %v1599
  %v1601 = vpop.f32.mrb[0].mxu0
  %1602 = vmatprep.mubr.f32.mxu0 0.0
  %1603 = vmatmul.mubr.f32.gmra.mrb[0].mxu0 %v1511
  %v1604 = vpop.f32.mrb[0].mxu0
  %v1605 = vadd.f32 0.0, %v1604
  %v1606 = vpop.f32.mrb[0].mxu0
  %1607 = vmatprep.mubr.f32.mxu0 0.0
  %1608 = vmatmul.mubr.f32.gmra.mrb[0].mxu0 %v1514
  %v1609 = vpop.f32.mrb[0].mxu0
  %v1610 = vadd.f32 0.0, %v1609
  %v1611 = vpop.f32.mrb[0].mxu0
  %1612 = vmatprep.mubr.f32.mxu0 0.0
  %1613 = vmatmul.mubr.f32.gmra.mrb[0].mxu0 %v1517
  %v1614 = vpop.f32.mrb[0].mxu0
  %v1615 = vadd.f32 0.0, %v1614
  %v1616 = vpop.f32.mrb[0].mxu0
  %1617 = vmatprep.mubr.f32.mxu0 0.0
  %1618 = vmatmul.mubr.f32.gmra.mrb[0].mxu0 %v1520
  %v1619 = vpop.f32.mrb[0].mxu0
  %v1620 = vadd.f32 0.0, %v1619
  %v1621 = vpop.f32.mrb[0].mxu0
  %1622 = vmatprep.mubr.f32.mxu0 0.0
  %1623 = vmatmul.mubr.f32.gmra.mrb[0].mxu0 %v1523
  %v1624 = vpop.f32.mrb[0].mxu0
  %v1625 = vadd.f32 0.0, %v1624
  %v1626 = vpop.f32.mrb[0].mxu0
  %1627 = vmatprep.mubr.f32.mxu0 0.0
  %1628 = vmatmul.mubr.f32.gmra.mrb[0].mxu0 %v1526
  %v1629 = vpop.f32.mrb[0].mxu0
  %v1630 = vadd.f32 0.0, %v1629
  %v1631 = vpop.f32.mrb[0].mxu0
  %1632 = vdwg.mxu0
  %v1633 = vadd.f32 %v1361, %v1595
  %v1634 = vadd.f32 %v1362, %v1600
  %v1635 = vadd.f32 %v1363, %v1605
  %v1636 = vadd.f32 %v1364, %v1610
  %v1637 = vadd.f32 %v1365, %v1615
  %v1638 = vadd.f32 %v1366, %v1620
  %v1639 = vadd.f32 %v1367, %v1625
  %v1640 = vadd.f32 %v1368, %v1630
  %v1641 = vld [vmem:[%s4] sm:$0xff]
  %v1642 = vld [vmem:[%s4 + $0x8] sm:$0xff]
  %v1643 = vld [vmem:[%s4 + $0x10] sm:$0xff]
  %v1644 = vld [vmem:[%s4 + $0x18] sm:$0xff]
  %v1645 = vld [vmem:[%s4 + $0x20] sm:$0xff]
  %v1646 = vld [vmem:[%s4 + $0x28] sm:$0xff]
  %v1647 = vld [vmem:[%s4 + $0x30] sm:$0xff]
  %v1648 = vld [vmem:[%s4 + $0x38] sm:$0xff]
  %1650 = vset.pattern.permute.xlu0 0
  %1651 = vperm.xlu0 %1650, %v1641
  %v1652 = vpop.permute.xlu0 %1651
  %1655 = vset.pattern.permute.xlu0 0
  %1656 = vperm.xlu0 %1655, %v1642
  %v1657 = vpop.permute.xlu0 %1656
  %1660 = vset.pattern.permute.xlu0 0
  %1661 = vperm.xlu0 %1660, %v1643
  %v1662 = vpop.permute.xlu0 %1661
  %1665 = vset.pattern.permute.xlu0 0
  %1666 = vperm.xlu0 %1665, %v1644
  %v1667 = vpop.permute.xlu0 %1666
  %1670 = vset.pattern.permute.xlu0 0
  %1671 = vperm.xlu0 %1670, %v1645
  %v1672 = vpop.permute.xlu0 %1671
  %1675 = vset.pattern.permute.xlu0 0
  %1676 = vperm.xlu0 %1675, %v1646
  %v1677 = vpop.permute.xlu0 %1676
  %1680 = vset.pattern.permute.xlu0 0
  %1681 = vperm.xlu0 %1680, %v1647
  %v1682 = vpop.permute.xlu0 %1681
  %1685 = vset.pattern.permute.xlu0 0
  %1686 = vperm.xlu0 %1685, %v1648
  %v1687 = vpop.permute.xlu0 %1686
  %v1689 = vadd.f32 %v1633, %v1652
  %v1690 = vadd.f32 %v1634, %v1657
  %v1691 = vadd.f32 %v1635, %v1662
  %v1692 = vadd.f32 %v1636, %v1667
  %v1693 = vadd.f32 %v1637, %v1672
  %v1694 = vadd.f32 %v1638, %v1677
  %v1695 = vadd.f32 %v1639, %v1682
  %v1696 = vadd.f32 %v1640, %v1687
  %v1697 = vmax.f32 %v1689, 0.0
  %v1698 = vmax.f32 %v1690, 0.0
  %v1699 = vmax.f32 %v1691, 0.0
  %v1700 = vmax.f32 %v1692, 0.0
  %v1701 = vmax.f32 %v1693, 0.0
  %v1702 = vmax.f32 %v1694, 0.0
  %v1703 = vmax.f32 %v1695, 0.0
  %v1704 = vmax.f32 %v1696, 0.0
  %v1705 = vld [vmem:[%s5] sm:$0xff]
  %v1706 = vld [vmem:[%s6] sm:$0xff]
  %1708 = vset.pattern.permute.xlu0 0
  %1709 = vperm.xlu0 %1708, %v1706
  %v1710 = vpop.permute.xlu0 %1709
  %v1713 = vsel %vm294, %v1705, 0
  %1715 = vmatprep.subr.mxu0 0.0
  %1716 = vmatpush1.msra.mxu0 %v1697
  %1717 = vmatprep.subr.mxu0 0.0
  %1718 = vmatpush1.msra.mxu0 %v1698
  %1719 = vmatprep.subr.mxu0 0.0
  %1720 = vmatpush1.msra.mxu0 %v1699
  %1721 = vmatprep.subr.mxu0 0.0
  %1722 = vmatpush1.msra.mxu0 %v1700
  %1723 = vmatprep.subr.mxu0 0.0
  %1724 = vmatpush1.msra.mxu0 %v1701
  %1725 = vmatprep.subr.mxu0 0.0
  %1726 = vmatpush1.msra.mxu0 %v1702
  %1727 = vmatprep.subr.mxu0 0.0
  %1728 = vmatpush1.msra.mxu0 %v1703
  %1729 = vmatprep.subr.mxu0 0.0
  %1730 = vmatpush1.msra.mxu0 %v1704
  %1731 = vmatprep.subr.mxu0 0.0
  %1732 = vmatpush1.msra.mxu0 0.0
  %1733 = vmatprep.subr.mxu0 0.0
  %1734 = vmatpush1.msra.mxu0 0.0
  %1735 = vmatprep.subr.mxu0 0.0
  %1736 = vmatpush1.msra.mxu0 0.0
  %1737 = vmatprep.subr.mxu0 0.0
  %1738 = vmatpush1.msra.mxu0 0.0
  %1739 = vmatprep.subr.mxu0 0.0
  %1740 = vmatpush1.msra.mxu0 0.0
  %1741 = vmatprep.subr.mxu0 0.0
  %1742 = vmatpush1.msra.mxu0 0.0
  %1743 = vmatprep.subr.mxu0 0.0
  %1744 = vmatpush1.msra.mxu0 0.0
  %1745 = vmatprep.subr.mxu0 0.0
  %1746 = vmatpush1.msra.mxu0 0.0
  %1747 = vmatprep.subr.mxu0 0.0
  %1748 = vmatpush1.msra.mxu0 0.0
  %1749 = vmatprep.subr.mxu0 0.0
  %1750 = vmatpush1.msra.mxu0 0.0
  %1751 = vmatprep.subr.mxu0 0.0
  %1752 = vmatpush1.msra.mxu0 0.0
  %1753 = vmatprep.subr.mxu0 0.0
  %1754 = vmatpush1.msra.mxu0 0.0
  %1755 = vmatprep.subr.mxu0 0.0
  %1756 = vmatpush1.msra.mxu0 0.0
  %1757 = vmatprep.subr.mxu0 0.0
  %1758 = vmatpush1.msra.mxu0 0.0
  %1759 = vmatprep.subr.mxu0 0.0
  %1760 = vmatpush1.msra.mxu0 0.0
  %1761 = vmatprep.subr.mxu0 0.0
  %1762 = vmatpush1.msra.mxu0 0.0
  %1763 = vmatprep.subr.mxu0 0.0
  %1764 = vmatpush1.msra.mxu0 0.0
  %1765 = vmatprep.subr.mxu0 0.0
  %1766 = vmatpush1.msra.mxu0 0.0
  %1767 = vmatprep.subr.mxu0 0.0
  %1768 = vmatpush1.msra.mxu0 0.0
  %1769 = vmatprep.subr.mxu0 0.0
  %1770 = vmatpush1.msra.mxu0 0.0
  %1771 = vmatprep.subr.mxu0 0.0
  %1772 = vmatpush1.msra.mxu0 0.0
  %1773 = vmatprep.subr.mxu0 0.0
  %1774 = vmatpush1.msra.mxu0 0.0
  %1775 = vmatprep.subr.mxu0 0.0
  %1776 = vmatpush1.msra.mxu0 0.0
  %1777 = vmatprep.subr.mxu0 0.0
  %1778 = vmatpush1.msra.mxu0 0.0
  %1779 = vmatprep.mubr.f32.mxu0 0.0
  %1780 = vmatmul.mubr.f32.gmra.mrb[0].mxu0 %v1713
  %v1781 = vpop.f32.mrb[0].mxu0
  %v1782 = vadd.f32 %v1710, %v1781
  %v1783 = vpop.f32.mrb[0].mxu0
  %1784 = vdwg.mxu0
  %1785 = vst [vmem:[%s7] sm:$0xff] %v1782
  // Predicated region
  $region30: #{mlp6_forward.1} parent=0 // pred_check
    _
  $region31: #{mlp6_forward.1} parent=0 // pred_check_branch
    %1787 = sbr.rel (0) target = $region33
  $region32: #{mlp6_forward.1} parent=0 // pred_region
    _
  $region33: #{mlp6_forward.1} parent=0 // pred_fallthru
    _
  // Predicated region
  $region34: #{mlp6_forward.1} parent=0 // pred_check
    _
  $region35: #{mlp6_forward.1} parent=0 // pred_check_branch
    %1789 = sbr.rel (0) target = $region37
  $region36: #{mlp6_forward.1} parent=0 // pred_region
    _
  $region37: #{mlp6_forward.1} parent=0 // pred_fallthru
    _

</llo_original>
